<compile_context>
chip_gen: v7x
topology: tpu7x:2x2x1
jax: 0.10.0
libtpu: 0.0.40
codegen_flags: <defaults>
</compile_context>

<pallas_src>
import functools

import numpy as np
import jax
import jax.numpy as jnp
from jax.experimental import pallas as pl
from jax.experimental.pallas import tpu as pltpu


# ----------------------------------------------------------------------------
# Host-side constants: 0/1 validity masks for the 9 conv taps (boundary handling)
# ----------------------------------------------------------------------------
@functools.lru_cache(maxsize=None)
def _tap_masks(h, w):
    """(9, 1, H*W) float32; mask[t, 0, p] == 1 iff the tap-t neighbour of flattened
    pixel p lies inside the image (zero padding of the 'same' 3x3 conv)."""
    hw = h * w
    rows = np.arange(hw) // w
    cols = np.arange(hw) % w
    m = np.zeros((9, 1, hw), np.float32)
    for t in range(9):
        di, dj = (t // 3) - 1, (t % 3) - 1
        m[t, 0] = ((rows + di >= 0) & (rows + di < h) &
                   (cols + dj >= 0) & (cols + dj < w)).astype(np.float32)
    return m


# ----------------------------------------------------------------------------
# Fused Pallas kernel:  q_sample  ->  3x3 conv (+bias+emb)  ->  L1/L2 partial sum
# ----------------------------------------------------------------------------
def _make_fused_kernel(h, w, loss_type, conditional):
    hw = h * w
    # flattened-HW offset of each 3x3 tap relative to the output pixel
    shifts = [((t // 3) - 1) * w + ((t % 3) - 1) for t in range(9)]

    def kernel(coeff_ref, *refs):
        # coeff_ref: (B, 2) f32 in SMEM: [alpha, sqrt(1 - alpha^2)] per batch
        if conditional:
            (sr_ref, xs_ref, nz_ref, wsr_ref, wxn_ref,
             bias_ref, mask_ref, o_ref) = refs
        else:
            xs_ref, nz_ref, wxn_ref, bias_ref, mask_ref, o_ref = refs
            sr_ref = wsr_ref = None

        bidx = pl.program_id(0)
        a = coeff_ref[bidx, 0]                      # continuous_sqrt_alpha_cumprod
        sig = coeff_ref[bidx, 1]                    # sqrt(1 - a^2)

        noise = nz_ref[0]                           # (C, HW) f32
        xn = a * xs_ref[0] + sig * noise            # q_sample, fused in-register
        sr = sr_ref[0] if conditional else None

        cout = wxn_ref.shape[1]
        acc = jnp.zeros((cout, hw), jnp.float32)

        # 9 conv taps, fully unrolled (static shifts / masks / weight slices).
        for t, s in enumerate(shifts):
            if s == 0:                              # centre tap: no shift, no mask
                xn_t, sr_t = xn, sr
            else:
                sh = (-s) % hw                      # static lane rotation (XLU)
                m = mask_ref[t]                     # (1, HW) 0/1 boundary mask
                xn_t = pltpu.roll(xn, sh, axis=1) * m
                sr_t = (pltpu.roll(sr, sh, axis=1) * m) if conditional else None
            # tiny-K matmuls; bf16 operands (native MXU path on v6e/v7x), f32 accum
            acc = acc + jnp.dot(wxn_ref[t], xn_t.astype(jnp.bfloat16),
                                preferred_element_type=jnp.float32)
            if conditional:
                acc = acc + jnp.dot(wsr_ref[t], sr_t.astype(jnp.bfloat16),
                                    preferred_element_type=jnp.float32)

        x_recon = acc + bias_ref[0]                 # + conv bias + noise-level emb
        diff = noise - x_recon                      # Cout == C of x_start / noise
        if loss_type == 'l1':
            part = jnp.sum(jnp.abs(diff))           # L1Loss(reduction='sum')
        else:
            part = jnp.sum(diff * diff)             # MSELoss(reduction='sum')
        o_ref[...] = part[None, None, None]

    return kernel


def fused_qsample_conv3x3_loss(coeffs, x_start, noise, w_xn_taps, bias_col,
                               sr=None, w_sr_taps=None, loss_type='l1'):
    """Runs the fused q_sample -> conv3x3(+emb) -> loss chain on TPU.

    coeffs     : (B, 2)  [alpha, sqrt(1-alpha^2)]            -> SMEM (scalar path)
    x_start    : (B, C, H, W) 'HR' image
    noise      : (B, C, H, W)
    w_xn_taps  : (9, Cout, C)   conv weights seen by x_noisy channels
    bias_col   : (B, Cout, 1)   conv bias + noise-level embedding
    sr         : optional (B, C, H, W) conditioning image ('SR')
    w_sr_taps  : optional (9, Cout, C) conv weights seen by the SR channels
    Returns the scalar summed loss.
    """
    b, c, h, w = x_start.shape
    hw = h * w
    cout = w_xn_taps.shape[1]
    conditional = sr is not None

    def img_spec():
        return pl.BlockSpec((1, c, hw), lambda i: (i, 0, 0))

    def wgt_spec():                                  # resident across the grid
        return pl.BlockSpec((9, cout, c), lambda i: (0, 0, 0))

    operands = [coeffs]                              # whole (B,2) array in SMEM
    in_specs = [pl.BlockSpec(memory_space=pltpu.MemorySpace.SMEM)]
    if conditional:
        operands.append(sr.reshape(b, c, hw))
        in_specs.append(img_spec())
    operands.append(x_start.reshape(b, c, hw))       # free reshapes of NCHW
    in_specs.append(img_spec())
    operands.append(noise.reshape(b, c, hw))
    in_specs.append(img_spec())
    if conditional:
        operands.append(w_sr_taps.astype(jnp.bfloat16))
        in_specs.append(wgt_spec())
    operands.append(w_xn_taps.astype(jnp.bfloat16))
    in_specs.append(wgt_spec())
    operands.append(bias_col.astype(jnp.float32))
    in_specs.append(pl.BlockSpec((1, cout, 1), lambda i: (i, 0, 0)))
    operands.append(jnp.asarray(_tap_masks(h, w)))
    in_specs.append(pl.BlockSpec((9, 1, hw), lambda i: (0, 0, 0)))

    kernel = _make_fused_kernel(h, w, loss_type, conditional)
    partials = pl.pallas_call(
        kernel,
        out_shape=jax.ShapeDtypeStruct((b, 1, 1), jnp.float32),
        grid_spec=pltpu.PrefetchScalarGridSpec(
            num_scalar_prefetch=0,
            grid=(b,),
            in_specs=in_specs,
            out_specs=pl.BlockSpec((1, 1, 1), lambda i: (i, 0, 0)),
        ),
        compiler_params=pltpu.CompilerParams(
            dimension_semantics=("parallel",)),      # shards batches across TCs
    )(*operands)
    return jnp.sum(partials)                         # tiny (B,) final reduce


# ----------------------------------------------------------------------------
# Synthetic denoise_fn parameters: 3x3 'same' conv (c_in -> c_out) + linear
# noise-level embedding added per output channel.  GaussianDiffusion fuses it
# directly into its Pallas kernel, so there is no standalone forward pass.
# ----------------------------------------------------------------------------
class SyntheticDenoiser:
    def __init__(self, c_in, c_out, key):
        k1, k2, k3, k4 = jax.random.split(key, 4)
        self.w_conv = 0.1 * jax.random.normal(k1, (c_out, c_in, 3, 3), jnp.float32)
        self.b_conv = 0.1 * jax.random.normal(k2, (c_out,), jnp.float32)
        self.w_emb = 0.1 * jax.random.normal(k3, (1, c_out), jnp.float32)
        self.b_emb = 0.1 * jax.random.normal(k4, (c_out,), jnp.float32)
        self.c_in, self.c_out = c_in, c_out

    def tap_weights(self):
        # (c_out, c_in, 3, 3) -> (9, c_out, c_in), tap-major (t = ki*3 + kj)
        return jnp.transpose(self.w_conv, (2, 3, 0, 1)).reshape(
            9, self.c_out, self.c_in)

    def split_tap_weights(self, c_cond):
        # conditional path: input is concat([SR, x_noisy], channel) -> the first
        # c_cond input channels see SR, the rest see x_noisy.
        w = self.tap_weights()
        return w[:, :, :c_cond], w[:, :, c_cond:]

    def channel_bias(self, noise_level):
        # conv bias + noise-level embedding, folded into one (B, c_out, 1) term
        emb = noise_level @ self.w_emb + self.b_emb          # (B, c_out)
        return (emb + self.b_conv)[:, :, None]


# ----------------------------------------------------------------------------
# GaussianDiffusion (JAX/Pallas version of the training forward / p_losses path)
# ----------------------------------------------------------------------------
class GaussianDiffusion:
    def __init__(self, denoise_fn, image_size, channels=1, loss_type='l1',
                 conditional=True, config_diff=None):
        if loss_type not in ('l1', 'l2'):
            raise NotImplementedError(loss_type)
        self.channels = channels
        self.image_size = image_size
        self.denoise_fn = denoise_fn
        self.loss_type = loss_type
        self.conditional = conditional
        self.num_timesteps = config_diff['num_steps']
        self._set_new_noise_schedule(config_diff)

    @staticmethod
    def _make_beta_schedule(schedule, n_timesteps, start, end):
        if schedule == 'linear':
            betas = np.linspace(start, end, n_timesteps, dtype=np.float64)
        elif schedule == 'quad':
            betas = np.linspace(start ** 0.5, end ** 0.5, n_timesteps) ** 2
        elif schedule == 'sigmoid':
            x = np.linspace(-6, 6, n_timesteps)
            betas = 1.0 / (1.0 + np.exp(-x)) * (end - start) + start
        else:
            raise NotImplementedError(schedule)
        return betas

    def _set_new_noise_schedule(self, cfg):
        betas = self._make_beta_schedule(cfg['schedule'], cfg['num_steps'],
                                         cfg['beta_start'], cfg['beta_end'])
        alphas = 1.0 - betas
        alphas_cumprod = np.cumprod(alphas, axis=0)
        # device-resident so the traced timestep gather stays on the TPU
        self.sqrt_alphas_cumprod_prev = jnp.asarray(
            np.sqrt(np.append(1.0, alphas_cumprod)), dtype=jnp.float32)
        # TODO(synk): posterior buffers are only needed by the (unported)
        # sampling path p_sample_loop; the training forward does not use them.

    def p_losses(self, x_in, key, noise=None):
        x_start = x_in['HR']                         # (B, C, H, W)
        b, c = x_start.shape[0], x_start.shape[1]
        k_t, k_a, k_n = jax.random.split(key, 3)

        # t ~ Uniform{1..T}, alpha ~ U(sqrt_ac_prev[t-1], sqrt_ac_prev[t]);
        # everything stays traced (no host sync), so p_losses jits cleanly.
        t = jax.random.randint(k_t, (), 1, self.num_timesteps + 1)
        lo = self.sqrt_alphas_cumprod_prev[t - 1]
        hi = self.sqrt_alphas_cumprod_prev[t]
        u = jax.random.uniform(k_a, (b,), jnp.float32)
        alpha = lo + u * (hi - lo)                   # (B,) continuous sqrt-alpha
        coeffs = jnp.stack(
            [alpha, jnp.sqrt(jnp.maximum(1.0 - alpha * alpha, 0.0))], axis=1)

        if noise is None:
            noise = jax.random.normal(k_n, x_start.shape, jnp.float32)

        den = self.denoise_fn
        bias_col = den.channel_bias(alpha[:, None])  # (B, Cout, 1) bias + emb
        if self.conditional:
            w_sr, w_xn = den.split_tap_weights(c)
            return fused_qsample_conv3x3_loss(
                coeffs, x_start, noise, w_xn, bias_col,
                sr=x_in['SR'], w_sr_taps=w_sr, loss_type=self.loss_type)
        w_xn = den.tap_weights()
        return fused_qsample_conv3x3_loss(
            coeffs, x_start, noise, w_xn, bias_col, loss_type=self.loss_type)

    def forward(self, x, key, *args, **kwargs):
        return self.p_losses(x, key, *args, **kwargs)


# ----------------------------------------------------------------------------
# main
# ----------------------------------------------------------------------------
if __name__ == "__main__":
    B, C, H, W = 2, 4, 16, 16
    key = jax.random.PRNGKey(0)
    k_hr, k_sr, k_den, k_fwd = jax.random.split(key, 4)

    x_hr = jax.random.normal(k_hr, (B, C, H, W), jnp.float32)
    x_sr = jax.random.normal(k_sr, (B, C, H, W), jnp.float32)

    config_diff = {'num_steps': 50, 'schedule': 'linear',
                   'beta_start': 1e-5, 'beta_end': 1e-2}

    denoise_fn = SyntheticDenoiser(c_in=2 * C, c_out=C, key=k_den)
    model = GaussianDiffusion(denoise_fn, image_size=H, channels=C,
                              loss_type='l1', conditional=True,
                              config_diff=config_diff)

    forward = jax.jit(model.forward)                 # whole p_losses is traceable
    loss = forward({'HR': x_hr, 'SR': x_sr}, k_fwd)
    loss = jax.block_until_ready(loss)
    assert loss.shape == () and bool(jnp.isfinite(loss))
    print("KERNEL_OK")
</pallas_src>

<mosaic_0001>
module attributes {stable_mosaic.version = 11 : i64} {
  func.func @kernel(%arg0: i32, %arg1: memref<2x2xf32, #tpu.memory_space<smem>>, %arg2: memref<1x4x256xf32, #tpu.memory_space<vmem>>, %arg3: memref<1x4x256xf32, #tpu.memory_space<vmem>>, %arg4: memref<1x4x256xf32, #tpu.memory_space<vmem>>, %arg5: memref<9x4x4xbf16, #tpu.memory_space<vmem>>, %arg6: memref<9x4x4xbf16, #tpu.memory_space<vmem>>, %arg7: memref<1x4x1xf32, #tpu.memory_space<vmem>>, %arg8: memref<9x1x256xf32, #tpu.memory_space<vmem>>, %arg9: memref<1x1x1xf32, #tpu.memory_space<vmem>>) attributes {dimension_semantics = [#tpu.dimension_semantics<parallel>], iteration_bounds = array<i64: 2>, scalar_prefetch = 0 : i64, scratch_operands = 0 : i64, tpu.core_type = #tpu.core_type<tc>, window_params = [{transform_indices = @transform_0, window_bounds = array<i64: 2, 2>}, {transform_indices = @transform_1, window_bounds = array<i64: 1, 4, 256>}, {transform_indices = @transform_2, window_bounds = array<i64: 1, 4, 256>}, {transform_indices = @transform_3, window_bounds = array<i64: 1, 4, 256>}, {pipeline_mode = #tpu.pipeline_mode<synchronous>, transform_indices = @transform_4, window_bounds = array<i64: 9, 4, 4>}, {pipeline_mode = #tpu.pipeline_mode<synchronous>, transform_indices = @transform_5, window_bounds = array<i64: 9, 4, 4>}, {transform_indices = @transform_6, window_bounds = array<i64: 1, 4, 1>}, {pipeline_mode = #tpu.pipeline_mode<synchronous>, transform_indices = @transform_7, window_bounds = array<i64: 9, 1, 256>}, {transform_indices = @transform_8, window_bounds = array<i64: 1, 1, 1>}]} {
    %0 = arith.index_cast %arg0 : i32 to index
    %c0 = arith.constant 0 : index
    %1 = memref.load %arg1[%0, %c0] : memref<2x2xf32, #tpu.memory_space<smem>>
    %2 = arith.index_cast %arg0 : i32 to index
    %c1 = arith.constant 1 : index
    %3 = memref.load %arg1[%2, %c1] : memref<2x2xf32, #tpu.memory_space<smem>>
    %c0_0 = arith.constant 0 : index
    %c0_1 = arith.constant 0 : index
    %c0_2 = arith.constant 0 : index
    %4 = vector.load %arg4[%c0_0, %c0_1, %c0_2] : memref<1x4x256xf32, #tpu.memory_space<vmem>>, vector<1x4x256xf32>
    %5 = vector.shape_cast %4 : vector<1x4x256xf32> to vector<4x256xf32>
    %c0_3 = arith.constant 0 : index
    %c0_4 = arith.constant 0 : index
    %c0_5 = arith.constant 0 : index
    %6 = vector.load %arg3[%c0_3, %c0_4, %c0_5] : memref<1x4x256xf32, #tpu.memory_space<vmem>>, vector<1x4x256xf32>
    %7 = vector.shape_cast %6 : vector<1x4x256xf32> to vector<4x256xf32>
    %8 = vector.broadcast %1 : f32 to vector<4x256xf32>
    %9 = arith.mulf %8, %7 : vector<4x256xf32>
    %10 = vector.broadcast %3 : f32 to vector<4x256xf32>
    %11 = arith.mulf %10, %5 : vector<4x256xf32>
    %12 = arith.addf %9, %11 : vector<4x256xf32>
    %c0_6 = arith.constant 0 : index
    %c0_7 = arith.constant 0 : index
    %c0_8 = arith.constant 0 : index
    %13 = vector.load %arg2[%c0_6, %c0_7, %c0_8] : memref<1x4x256xf32, #tpu.memory_space<vmem>>, vector<1x4x256xf32>
    %14 = vector.shape_cast %13 : vector<1x4x256xf32> to vector<4x256xf32>
    %cst = arith.constant 0.000000e+00 : f32
    %15 = vector.broadcast %cst : f32 to vector<4x256xf32>
    %c0_9 = arith.constant 0 : index
    %c0_10 = arith.constant 0 : index
    %c0_11 = arith.constant 0 : index
    %16 = vector.load %arg8[%c0_9, %c0_10, %c0_11] : memref<9x1x256xf32, #tpu.memory_space<vmem>>, vector<1x1x256xf32>
    %17 = vector.shape_cast %16 : vector<1x1x256xf32> to vector<1x256xf32>
    %c17_i32 = arith.constant 17 : i32
    %18 = tpu.dynamic_rotate %12 by %c17_i32 dim 1 : vector<4x256xf32>, i32 -> vector<4x256xf32>
    %19 = vector.broadcast %17 : vector<1x256xf32> to vector<4x256xf32>
    %20 = arith.mulf %18, %19 : vector<4x256xf32>
    %c17_i32_12 = arith.constant 17 : i32
    %21 = tpu.dynamic_rotate %14 by %c17_i32_12 dim 1 : vector<4x256xf32>, i32 -> vector<4x256xf32>
    %22 = vector.broadcast %17 : vector<1x256xf32> to vector<4x256xf32>
    %23 = arith.mulf %21, %22 : vector<4x256xf32>
    %c0_13 = arith.constant 0 : index
    %c0_14 = arith.constant 0 : index
    %c0_15 = arith.constant 0 : index
    %24 = vector.load %arg6[%c0_13, %c0_14, %c0_15] : memref<9x4x4xbf16, #tpu.memory_space<vmem>>, vector<1x4x4xbf16>
    %25 = vector.shape_cast %24 : vector<1x4x4xbf16> to vector<4x4xbf16>
    %26 = arith.truncf %20 : vector<4x256xf32> to vector<4x256xbf16>
    %cst_16 = arith.constant dense<0.000000e+00> : vector<4x256xf32>
    %27 = tpu.matmul %25, %26, %cst_16 {dimension_numbers = #tpu.dot_dimension_numbers<[1], [0], [0], [1], [0, 0, 1, 1], [], []>} : vector<4x4xbf16>, vector<4x256xbf16>, vector<4x256xf32> -> vector<4x256xf32>
    %28 = arith.addf %15, %27 : vector<4x256xf32>
    %c0_17 = arith.constant 0 : index
    %c0_18 = arith.constant 0 : index
    %c0_19 = arith.constant 0 : index
    %29 = vector.load %arg5[%c0_17, %c0_18, %c0_19] : memref<9x4x4xbf16, #tpu.memory_space<vmem>>, vector<1x4x4xbf16>
    %30 = vector.shape_cast %29 : vector<1x4x4xbf16> to vector<4x4xbf16>
    %31 = arith.truncf %23 : vector<4x256xf32> to vector<4x256xbf16>
    %cst_20 = arith.constant dense<0.000000e+00> : vector<4x256xf32>
    %32 = tpu.matmul %30, %31, %cst_20 {dimension_numbers = #tpu.dot_dimension_numbers<[1], [0], [0], [1], [0, 0, 1, 1], [], []>} : vector<4x4xbf16>, vector<4x256xbf16>, vector<4x256xf32> -> vector<4x256xf32>
    %33 = arith.addf %28, %32 : vector<4x256xf32>
    %c1_21 = arith.constant 1 : index
    %c0_22 = arith.constant 0 : index
    %c0_23 = arith.constant 0 : index
    %34 = vector.load %arg8[%c1_21, %c0_22, %c0_23] : memref<9x1x256xf32, #tpu.memory_space<vmem>>, vector<1x1x256xf32>
    %35 = vector.shape_cast %34 : vector<1x1x256xf32> to vector<1x256xf32>
    %c16_i32 = arith.constant 16 : i32
    %36 = tpu.dynamic_rotate %12 by %c16_i32 dim 1 : vector<4x256xf32>, i32 -> vector<4x256xf32>
    %37 = vector.broadcast %35 : vector<1x256xf32> to vector<4x256xf32>
    %38 = arith.mulf %36, %37 : vector<4x256xf32>
    %c16_i32_24 = arith.constant 16 : i32
    %39 = tpu.dynamic_rotate %14 by %c16_i32_24 dim 1 : vector<4x256xf32>, i32 -> vector<4x256xf32>
    %40 = vector.broadcast %35 : vector<1x256xf32> to vector<4x256xf32>
    %41 = arith.mulf %39, %40 : vector<4x256xf32>
    %c1_25 = arith.constant 1 : index
    %c0_26 = arith.constant 0 : index
    %c0_27 = arith.constant 0 : index
    %42 = vector.load %arg6[%c1_25, %c0_26, %c0_27] : memref<9x4x4xbf16, #tpu.memory_space<vmem>>, vector<1x4x4xbf16>
    %43 = vector.shape_cast %42 : vector<1x4x4xbf16> to vector<4x4xbf16>
    %44 = arith.truncf %38 : vector<4x256xf32> to vector<4x256xbf16>
    %cst_28 = arith.constant dense<0.000000e+00> : vector<4x256xf32>
    %45 = tpu.matmul %43, %44, %cst_28 {dimension_numbers = #tpu.dot_dimension_numbers<[1], [0], [0], [1], [0, 0, 1, 1], [], []>} : vector<4x4xbf16>, vector<4x256xbf16>, vector<4x256xf32> -> vector<4x256xf32>
    %46 = arith.addf %33, %45 : vector<4x256xf32>
    %c1_29 = arith.constant 1 : index
    %c0_30 = arith.constant 0 : index
    %c0_31 = arith.constant 0 : index
    %47 = vector.load %arg5[%c1_29, %c0_30, %c0_31] : memref<9x4x4xbf16, #tpu.memory_space<vmem>>, vector<1x4x4xbf16>
    %48 = vector.shape_cast %47 : vector<1x4x4xbf16> to vector<4x4xbf16>
    %49 = arith.truncf %41 : vector<4x256xf32> to vector<4x256xbf16>
    %cst_32 = arith.constant dense<0.000000e+00> : vector<4x256xf32>
    %50 = tpu.matmul %48, %49, %cst_32 {dimension_numbers = #tpu.dot_dimension_numbers<[1], [0], [0], [1], [0, 0, 1, 1], [], []>} : vector<4x4xbf16>, vector<4x256xbf16>, vector<4x256xf32> -> vector<4x256xf32>
    %51 = arith.addf %46, %50 : vector<4x256xf32>
    %c2 = arith.constant 2 : index
    %c0_33 = arith.constant 0 : index
    %c0_34 = arith.constant 0 : index
    %52 = vector.load %arg8[%c2, %c0_33, %c0_34] : memref<9x1x256xf32, #tpu.memory_space<vmem>>, vector<1x1x256xf32>
    %53 = vector.shape_cast %52 : vector<1x1x256xf32> to vector<1x256xf32>
    %c15_i32 = arith.constant 15 : i32
    %54 = tpu.dynamic_rotate %12 by %c15_i32 dim 1 : vector<4x256xf32>, i32 -> vector<4x256xf32>
    %55 = vector.broadcast %53 : vector<1x256xf32> to vector<4x256xf32>
    %56 = arith.mulf %54, %55 : vector<4x256xf32>
    %c15_i32_35 = arith.constant 15 : i32
    %57 = tpu.dynamic_rotate %14 by %c15_i32_35 dim 1 : vector<4x256xf32>, i32 -> vector<4x256xf32>
    %58 = vector.broadcast %53 : vector<1x256xf32> to vector<4x256xf32>
    %59 = arith.mulf %57, %58 : vector<4x256xf32>
    %c2_36 = arith.constant 2 : index
    %c0_37 = arith.constant 0 : index
    %c0_38 = arith.constant 0 : index
    %60 = vector.load %arg6[%c2_36, %c0_37, %c0_38] : memref<9x4x4xbf16, #tpu.memory_space<vmem>>, vector<1x4x4xbf16>
    %61 = vector.shape_cast %60 : vector<1x4x4xbf16> to vector<4x4xbf16>
    %62 = arith.truncf %56 : vector<4x256xf32> to vector<4x256xbf16>
    %cst_39 = arith.constant dense<0.000000e+00> : vector<4x256xf32>
    %63 = tpu.matmul %61, %62, %cst_39 {dimension_numbers = #tpu.dot_dimension_numbers<[1], [0], [0], [1], [0, 0, 1, 1], [], []>} : vector<4x4xbf16>, vector<4x256xbf16>, vector<4x256xf32> -> vector<4x256xf32>
    %64 = arith.addf %51, %63 : vector<4x256xf32>
    %c2_40 = arith.constant 2 : index
    %c0_41 = arith.constant 0 : index
    %c0_42 = arith.constant 0 : index
    %65 = vector.load %arg5[%c2_40, %c0_41, %c0_42] : memref<9x4x4xbf16, #tpu.memory_space<vmem>>, vector<1x4x4xbf16>
    %66 = vector.shape_cast %65 : vector<1x4x4xbf16> to vector<4x4xbf16>
    %67 = arith.truncf %59 : vector<4x256xf32> to vector<4x256xbf16>
    %cst_43 = arith.constant dense<0.000000e+00> : vector<4x256xf32>
    %68 = tpu.matmul %66, %67, %cst_43 {dimension_numbers = #tpu.dot_dimension_numbers<[1], [0], [0], [1], [0, 0, 1, 1], [], []>} : vector<4x4xbf16>, vector<4x256xbf16>, vector<4x256xf32> -> vector<4x256xf32>
    %69 = arith.addf %64, %68 : vector<4x256xf32>
    %c3 = arith.constant 3 : index
    %c0_44 = arith.constant 0 : index
    %c0_45 = arith.constant 0 : index
    %70 = vector.load %arg8[%c3, %c0_44, %c0_45] : memref<9x1x256xf32, #tpu.memory_space<vmem>>, vector<1x1x256xf32>
    %71 = vector.shape_cast %70 : vector<1x1x256xf32> to vector<1x256xf32>
    %c1_i32 = arith.constant 1 : i32
    %72 = tpu.dynamic_rotate %12 by %c1_i32 dim 1 : vector<4x256xf32>, i32 -> vector<4x256xf32>
    %73 = vector.broadcast %71 : vector<1x256xf32> to vector<4x256xf32>
    %74 = arith.mulf %72, %73 : vector<4x256xf32>
    %c1_i32_46 = arith.constant 1 : i32
    %75 = tpu.dynamic_rotate %14 by %c1_i32_46 dim 1 : vector<4x256xf32>, i32 -> vector<4x256xf32>
    %76 = vector.broadcast %71 : vector<1x256xf32> to vector<4x256xf32>
    %77 = arith.mulf %75, %76 : vector<4x256xf32>
    %c3_47 = arith.constant 3 : index
    %c0_48 = arith.constant 0 : index
    %c0_49 = arith.constant 0 : index
    %78 = vector.load %arg6[%c3_47, %c0_48, %c0_49] : memref<9x4x4xbf16, #tpu.memory_space<vmem>>, vector<1x4x4xbf16>
    %79 = vector.shape_cast %78 : vector<1x4x4xbf16> to vector<4x4xbf16>
    %80 = arith.truncf %74 : vector<4x256xf32> to vector<4x256xbf16>
    %cst_50 = arith.constant dense<0.000000e+00> : vector<4x256xf32>
    %81 = tpu.matmul %79, %80, %cst_50 {dimension_numbers = #tpu.dot_dimension_numbers<[1], [0], [0], [1], [0, 0, 1, 1], [], []>} : vector<4x4xbf16>, vector<4x256xbf16>, vector<4x256xf32> -> vector<4x256xf32>
    %82 = arith.addf %69, %81 : vector<4x256xf32>
    %c3_51 = arith.constant 3 : index
    %c0_52 = arith.constant 0 : index
    %c0_53 = arith.constant 0 : index
    %83 = vector.load %arg5[%c3_51, %c0_52, %c0_53] : memref<9x4x4xbf16, #tpu.memory_space<vmem>>, vector<1x4x4xbf16>
    %84 = vector.shape_cast %83 : vector<1x4x4xbf16> to vector<4x4xbf16>
    %85 = arith.truncf %77 : vector<4x256xf32> to vector<4x256xbf16>
    %cst_54 = arith.constant dense<0.000000e+00> : vector<4x256xf32>
    %86 = tpu.matmul %84, %85, %cst_54 {dimension_numbers = #tpu.dot_dimension_numbers<[1], [0], [0], [1], [0, 0, 1, 1], [], []>} : vector<4x4xbf16>, vector<4x256xbf16>, vector<4x256xf32> -> vector<4x256xf32>
    %87 = arith.addf %82, %86 : vector<4x256xf32>
    %c4 = arith.constant 4 : index
    %c0_55 = arith.constant 0 : index
    %c0_56 = arith.constant 0 : index
    %88 = vector.load %arg6[%c4, %c0_55, %c0_56] : memref<9x4x4xbf16, #tpu.memory_space<vmem>>, vector<1x4x4xbf16>
    %89 = vector.shape_cast %88 : vector<1x4x4xbf16> to vector<4x4xbf16>
    %90 = arith.truncf %12 : vector<4x256xf32> to vector<4x256xbf16>
    %cst_57 = arith.constant dense<0.000000e+00> : vector<4x256xf32>
    %91 = tpu.matmul %89, %90, %cst_57 {dimension_numbers = #tpu.dot_dimension_numbers<[1], [0], [0], [1], [0, 0, 1, 1], [], []>} : vector<4x4xbf16>, vector<4x256xbf16>, vector<4x256xf32> -> vector<4x256xf32>
    %92 = arith.addf %87, %91 : vector<4x256xf32>
    %c4_58 = arith.constant 4 : index
    %c0_59 = arith.constant 0 : index
    %c0_60 = arith.constant 0 : index
    %93 = vector.load %arg5[%c4_58, %c0_59, %c0_60] : memref<9x4x4xbf16, #tpu.memory_space<vmem>>, vector<1x4x4xbf16>
    %94 = vector.shape_cast %93 : vector<1x4x4xbf16> to vector<4x4xbf16>
    %95 = arith.truncf %14 : vector<4x256xf32> to vector<4x256xbf16>
    %cst_61 = arith.constant dense<0.000000e+00> : vector<4x256xf32>
    %96 = tpu.matmul %94, %95, %cst_61 {dimension_numbers = #tpu.dot_dimension_numbers<[1], [0], [0], [1], [0, 0, 1, 1], [], []>} : vector<4x4xbf16>, vector<4x256xbf16>, vector<4x256xf32> -> vector<4x256xf32>
    %97 = arith.addf %92, %96 : vector<4x256xf32>
    %c5 = arith.constant 5 : index
    %c0_62 = arith.constant 0 : index
    %c0_63 = arith.constant 0 : index
    %98 = vector.load %arg8[%c5, %c0_62, %c0_63] : memref<9x1x256xf32, #tpu.memory_space<vmem>>, vector<1x1x256xf32>
    %99 = vector.shape_cast %98 : vector<1x1x256xf32> to vector<1x256xf32>
    %c255_i32 = arith.constant 255 : i32
    %100 = tpu.dynamic_rotate %12 by %c255_i32 dim 1 : vector<4x256xf32>, i32 -> vector<4x256xf32>
    %101 = vector.broadcast %99 : vector<1x256xf32> to vector<4x256xf32>
    %102 = arith.mulf %100, %101 : vector<4x256xf32>
    %c255_i32_64 = arith.constant 255 : i32
    %103 = tpu.dynamic_rotate %14 by %c255_i32_64 dim 1 : vector<4x256xf32>, i32 -> vector<4x256xf32>
    %104 = vector.broadcast %99 : vector<1x256xf32> to vector<4x256xf32>
    %105 = arith.mulf %103, %104 : vector<4x256xf32>
    %c5_65 = arith.constant 5 : index
    %c0_66 = arith.constant 0 : index
    %c0_67 = arith.constant 0 : index
    %106 = vector.load %arg6[%c5_65, %c0_66, %c0_67] : memref<9x4x4xbf16, #tpu.memory_space<vmem>>, vector<1x4x4xbf16>
    %107 = vector.shape_cast %106 : vector<1x4x4xbf16> to vector<4x4xbf16>
    %108 = arith.truncf %102 : vector<4x256xf32> to vector<4x256xbf16>
    %cst_68 = arith.constant dense<0.000000e+00> : vector<4x256xf32>
    %109 = tpu.matmul %107, %108, %cst_68 {dimension_numbers = #tpu.dot_dimension_numbers<[1], [0], [0], [1], [0, 0, 1, 1], [], []>} : vector<4x4xbf16>, vector<4x256xbf16>, vector<4x256xf32> -> vector<4x256xf32>
    %110 = arith.addf %97, %109 : vector<4x256xf32>
    %c5_69 = arith.constant 5 : index
    %c0_70 = arith.constant 0 : index
    %c0_71 = arith.constant 0 : index
    %111 = vector.load %arg5[%c5_69, %c0_70, %c0_71] : memref<9x4x4xbf16, #tpu.memory_space<vmem>>, vector<1x4x4xbf16>
    %112 = vector.shape_cast %111 : vector<1x4x4xbf16> to vector<4x4xbf16>
    %113 = arith.truncf %105 : vector<4x256xf32> to vector<4x256xbf16>
    %cst_72 = arith.constant dense<0.000000e+00> : vector<4x256xf32>
    %114 = tpu.matmul %112, %113, %cst_72 {dimension_numbers = #tpu.dot_dimension_numbers<[1], [0], [0], [1], [0, 0, 1, 1], [], []>} : vector<4x4xbf16>, vector<4x256xbf16>, vector<4x256xf32> -> vector<4x256xf32>
    %115 = arith.addf %110, %114 : vector<4x256xf32>
    %c6 = arith.constant 6 : index
    %c0_73 = arith.constant 0 : index
    %c0_74 = arith.constant 0 : index
    %116 = vector.load %arg8[%c6, %c0_73, %c0_74] : memref<9x1x256xf32, #tpu.memory_space<vmem>>, vector<1x1x256xf32>
    %117 = vector.shape_cast %116 : vector<1x1x256xf32> to vector<1x256xf32>
    %c241_i32 = arith.constant 241 : i32
    %118 = tpu.dynamic_rotate %12 by %c241_i32 dim 1 : vector<4x256xf32>, i32 -> vector<4x256xf32>
    %119 = vector.broadcast %117 : vector<1x256xf32> to vector<4x256xf32>
    %120 = arith.mulf %118, %119 : vector<4x256xf32>
    %c241_i32_75 = arith.constant 241 : i32
    %121 = tpu.dynamic_rotate %14 by %c241_i32_75 dim 1 : vector<4x256xf32>, i32 -> vector<4x256xf32>
    %122 = vector.broadcast %117 : vector<1x256xf32> to vector<4x256xf32>
    %123 = arith.mulf %121, %122 : vector<4x256xf32>
    %c6_76 = arith.constant 6 : index
    %c0_77 = arith.constant 0 : index
    %c0_78 = arith.constant 0 : index
    %124 = vector.load %arg6[%c6_76, %c0_77, %c0_78] : memref<9x4x4xbf16, #tpu.memory_space<vmem>>, vector<1x4x4xbf16>
    %125 = vector.shape_cast %124 : vector<1x4x4xbf16> to vector<4x4xbf16>
    %126 = arith.truncf %120 : vector<4x256xf32> to vector<4x256xbf16>
    %cst_79 = arith.constant dense<0.000000e+00> : vector<4x256xf32>
    %127 = tpu.matmul %125, %126, %cst_79 {dimension_numbers = #tpu.dot_dimension_numbers<[1], [0], [0], [1], [0, 0, 1, 1], [], []>} : vector<4x4xbf16>, vector<4x256xbf16>, vector<4x256xf32> -> vector<4x256xf32>
    %128 = arith.addf %115, %127 : vector<4x256xf32>
    %c6_80 = arith.constant 6 : index
    %c0_81 = arith.constant 0 : index
    %c0_82 = arith.constant 0 : index
    %129 = vector.load %arg5[%c6_80, %c0_81, %c0_82] : memref<9x4x4xbf16, #tpu.memory_space<vmem>>, vector<1x4x4xbf16>
    %130 = vector.shape_cast %129 : vector<1x4x4xbf16> to vector<4x4xbf16>
    %131 = arith.truncf %123 : vector<4x256xf32> to vector<4x256xbf16>
    %cst_83 = arith.constant dense<0.000000e+00> : vector<4x256xf32>
    %132 = tpu.matmul %130, %131, %cst_83 {dimension_numbers = #tpu.dot_dimension_numbers<[1], [0], [0], [1], [0, 0, 1, 1], [], []>} : vector<4x4xbf16>, vector<4x256xbf16>, vector<4x256xf32> -> vector<4x256xf32>
    %133 = arith.addf %128, %132 : vector<4x256xf32>
    %c7 = arith.constant 7 : index
    %c0_84 = arith.constant 0 : index
    %c0_85 = arith.constant 0 : index
    %134 = vector.load %arg8[%c7, %c0_84, %c0_85] : memref<9x1x256xf32, #tpu.memory_space<vmem>>, vector<1x1x256xf32>
    %135 = vector.shape_cast %134 : vector<1x1x256xf32> to vector<1x256xf32>
    %c240_i32 = arith.constant 240 : i32
    %136 = tpu.dynamic_rotate %12 by %c240_i32 dim 1 : vector<4x256xf32>, i32 -> vector<4x256xf32>
    %137 = vector.broadcast %135 : vector<1x256xf32> to vector<4x256xf32>
    %138 = arith.mulf %136, %137 : vector<4x256xf32>
    %c240_i32_86 = arith.constant 240 : i32
    %139 = tpu.dynamic_rotate %14 by %c240_i32_86 dim 1 : vector<4x256xf32>, i32 -> vector<4x256xf32>
    %140 = vector.broadcast %135 : vector<1x256xf32> to vector<4x256xf32>
    %141 = arith.mulf %139, %140 : vector<4x256xf32>
    %c7_87 = arith.constant 7 : index
    %c0_88 = arith.constant 0 : index
    %c0_89 = arith.constant 0 : index
    %142 = vector.load %arg6[%c7_87, %c0_88, %c0_89] : memref<9x4x4xbf16, #tpu.memory_space<vmem>>, vector<1x4x4xbf16>
    %143 = vector.shape_cast %142 : vector<1x4x4xbf16> to vector<4x4xbf16>
    %144 = arith.truncf %138 : vector<4x256xf32> to vector<4x256xbf16>
    %cst_90 = arith.constant dense<0.000000e+00> : vector<4x256xf32>
    %145 = tpu.matmul %143, %144, %cst_90 {dimension_numbers = #tpu.dot_dimension_numbers<[1], [0], [0], [1], [0, 0, 1, 1], [], []>} : vector<4x4xbf16>, vector<4x256xbf16>, vector<4x256xf32> -> vector<4x256xf32>
    %146 = arith.addf %133, %145 : vector<4x256xf32>
    %c7_91 = arith.constant 7 : index
    %c0_92 = arith.constant 0 : index
    %c0_93 = arith.constant 0 : index
    %147 = vector.load %arg5[%c7_91, %c0_92, %c0_93] : memref<9x4x4xbf16, #tpu.memory_space<vmem>>, vector<1x4x4xbf16>
    %148 = vector.shape_cast %147 : vector<1x4x4xbf16> to vector<4x4xbf16>
    %149 = arith.truncf %141 : vector<4x256xf32> to vector<4x256xbf16>
    %cst_94 = arith.constant dense<0.000000e+00> : vector<4x256xf32>
    %150 = tpu.matmul %148, %149, %cst_94 {dimension_numbers = #tpu.dot_dimension_numbers<[1], [0], [0], [1], [0, 0, 1, 1], [], []>} : vector<4x4xbf16>, vector<4x256xbf16>, vector<4x256xf32> -> vector<4x256xf32>
    %151 = arith.addf %146, %150 : vector<4x256xf32>
    %c8 = arith.constant 8 : index
    %c0_95 = arith.constant 0 : index
    %c0_96 = arith.constant 0 : index
    %152 = vector.load %arg8[%c8, %c0_95, %c0_96] : memref<9x1x256xf32, #tpu.memory_space<vmem>>, vector<1x1x256xf32>
    %153 = vector.shape_cast %152 : vector<1x1x256xf32> to vector<1x256xf32>
    %c239_i32 = arith.constant 239 : i32
    %154 = tpu.dynamic_rotate %12 by %c239_i32 dim 1 : vector<4x256xf32>, i32 -> vector<4x256xf32>
    %155 = vector.broadcast %153 : vector<1x256xf32> to vector<4x256xf32>
    %156 = arith.mulf %154, %155 : vector<4x256xf32>
    %c239_i32_97 = arith.constant 239 : i32
    %157 = tpu.dynamic_rotate %14 by %c239_i32_97 dim 1 : vector<4x256xf32>, i32 -> vector<4x256xf32>
    %158 = vector.broadcast %153 : vector<1x256xf32> to vector<4x256xf32>
    %159 = arith.mulf %157, %158 : vector<4x256xf32>
    %c8_98 = arith.constant 8 : index
    %c0_99 = arith.constant 0 : index
    %c0_100 = arith.constant 0 : index
    %160 = vector.load %arg6[%c8_98, %c0_99, %c0_100] : memref<9x4x4xbf16, #tpu.memory_space<vmem>>, vector<1x4x4xbf16>
    %161 = vector.shape_cast %160 : vector<1x4x4xbf16> to vector<4x4xbf16>
    %162 = arith.truncf %156 : vector<4x256xf32> to vector<4x256xbf16>
    %cst_101 = arith.constant dense<0.000000e+00> : vector<4x256xf32>
    %163 = tpu.matmul %161, %162, %cst_101 {dimension_numbers = #tpu.dot_dimension_numbers<[1], [0], [0], [1], [0, 0, 1, 1], [], []>} : vector<4x4xbf16>, vector<4x256xbf16>, vector<4x256xf32> -> vector<4x256xf32>
    %164 = arith.addf %151, %163 : vector<4x256xf32>
    %c8_102 = arith.constant 8 : index
    %c0_103 = arith.constant 0 : index
    %c0_104 = arith.constant 0 : index
    %165 = vector.load %arg5[%c8_102, %c0_103, %c0_104] : memref<9x4x4xbf16, #tpu.memory_space<vmem>>, vector<1x4x4xbf16>
    %166 = vector.shape_cast %165 : vector<1x4x4xbf16> to vector<4x4xbf16>
    %167 = arith.truncf %159 : vector<4x256xf32> to vector<4x256xbf16>
    %cst_105 = arith.constant dense<0.000000e+00> : vector<4x256xf32>
    %168 = tpu.matmul %166, %167, %cst_105 {dimension_numbers = #tpu.dot_dimension_numbers<[1], [0], [0], [1], [0, 0, 1, 1], [], []>} : vector<4x4xbf16>, vector<4x256xbf16>, vector<4x256xf32> -> vector<4x256xf32>
    %169 = arith.addf %164, %168 : vector<4x256xf32>
    %c0_106 = arith.constant 0 : index
    %c0_107 = arith.constant 0 : index
    %c0_108 = arith.constant 0 : index
    %170 = vector.load %arg7[%c0_106, %c0_107, %c0_108] : memref<1x4x1xf32, #tpu.memory_space<vmem>>, vector<1x4x1xf32>
    %171 = vector.shape_cast %170 : vector<1x4x1xf32> to vector<4x1xf32>
    %172 = vector.broadcast %171 : vector<4x1xf32> to vector<4x256xf32>
    %173 = arith.addf %169, %172 : vector<4x256xf32>
    %174 = arith.subf %5, %173 : vector<4x256xf32>
    %175 = math.absf %174 : vector<4x256xf32>
    %176 = vector.shape_cast %175 : vector<4x256xf32> to vector<1x4x256xf32>
    %cst_109 = arith.constant dense<0.000000e+00> : vector<1xf32>
    %177 = vector.multi_reduction <add>, %176, %cst_109 [1, 2] : vector<1x4x256xf32> to vector<1xf32>
    %178 = vector.shape_cast %177 : vector<1xf32> to vector<1x1x1xf32>
    %179 = vector.extract %178[0, 0, 0] : f32 from vector<1x1x1xf32>
    %180 = vector.broadcast %179 : f32 to vector<1x1x1xf32>
    %c0_110 = arith.constant 0 : index
    %c0_111 = arith.constant 0 : index
    %c0_112 = arith.constant 0 : index
    %181 = vector.load %arg9[%c0_110, %c0_111, %c0_112] : memref<1x1x1xf32, #tpu.memory_space<vmem>>, vector<1x1x1xf32>
    tpu.vector_store %arg9[%c0_110, %c0_111, %c0_112], %180 {strides = array<i32>} : memref<1x1x1xf32, #tpu.memory_space<vmem>>, vector<1x1x1xf32>,
    return
  }
  func.func @transform_0(%arg0: i32) -> (i32, i32) {
    %c0_i32 = arith.constant 0 : i32
    %c0_i32_0 = arith.constant 0 : i32
    %c0_i32_1 = arith.constant 0 : i32
    return %c0_i32, %c0_i32_0 : i32, i32
  }
  func.func @transform_1(%arg0: i32) -> (i32, i32, i32) {
    %c0_i32 = arith.constant 0 : i32
    %c0_i32_0 = arith.constant 0 : i32
    %c0_i32_1 = arith.constant 0 : i32
    return %arg0, %c0_i32, %c0_i32_0 : i32, i32, i32
  }
  func.func @transform_2(%arg0: i32) -> (i32, i32, i32) {
    %c0_i32 = arith.constant 0 : i32
    %c0_i32_0 = arith.constant 0 : i32
    %c0_i32_1 = arith.constant 0 : i32
    return %arg0, %c0_i32, %c0_i32_0 : i32, i32, i32
  }
  func.func @transform_3(%arg0: i32) -> (i32, i32, i32) {
    %c0_i32 = arith.constant 0 : i32
    %c0_i32_0 = arith.constant 0 : i32
    %c0_i32_1 = arith.constant 0 : i32
    return %arg0, %c0_i32, %c0_i32_0 : i32, i32, i32
  }
  func.func @transform_4(%arg0: i32) -> (i32, i32, i32) {
    %c0_i32 = arith.constant 0 : i32
    %c0_i32_0 = arith.constant 0 : i32
    %c0_i32_1 = arith.constant 0 : i32
    %c0_i32_2 = arith.constant 0 : i32
    return %c0_i32, %c0_i32_0, %c0_i32_1 : i32, i32, i32
  }
  func.func @transform_5(%arg0: i32) -> (i32, i32, i32) {
    %c0_i32 = arith.constant 0 : i32
    %c0_i32_0 = arith.constant 0 : i32
    %c0_i32_1 = arith.constant 0 : i32
    %c0_i32_2 = arith.constant 0 : i32
    return %c0_i32, %c0_i32_0, %c0_i32_1 : i32, i32, i32
  }
  func.func @transform_6(%arg0: i32) -> (i32, i32, i32) {
    %c0_i32 = arith.constant 0 : i32
    %c0_i32_0 = arith.constant 0 : i32
    %c0_i32_1 = arith.constant 0 : i32
    return %arg0, %c0_i32, %c0_i32_0 : i32, i32, i32
  }
  func.func @transform_7(%arg0: i32) -> (i32, i32, i32) {
    %c0_i32 = arith.constant 0 : i32
    %c0_i32_0 = arith.constant 0 : i32
    %c0_i32_1 = arith.constant 0 : i32
    %c0_i32_2 = arith.constant 0 : i32
    return %c0_i32, %c0_i32_0, %c0_i32_1 : i32, i32, i32
  }
  func.func @transform_8(%arg0: i32) -> (i32, i32, i32) {
    %c0_i32 = arith.constant 0 : i32
    %c0_i32_0 = arith.constant 0 : i32
    %c0_i32_1 = arith.constant 0 : i32
    return %arg0, %c0_i32, %c0_i32_0 : i32, i32, i32
  }
}

</mosaic_0001>

<llo_original>
// kernel: forward.1
$region0: #{forward.1}
  #allocation0 [shape = 'u32[]', space=smem, size = 0x4, offset = 0x4, fixed_abs, tag = 'smem constant byte address 0x4 - core index']
  #allocation1 [shape = 'u32[144,128]{1,0:T(1,128)}', space=vmem, size = 0x12000, scoped, tag = 'internal scratch']
  %s0 = inlined_call_operand.vmem [shape: f32[2,2], index: 0, kind: input, shape index: {}]
  %s1 = inlined_call_operand.vmem [shape: f32[2,4,256], index: 1, kind: input, shape index: {}]
  %s2 = inlined_call_operand.vmem [shape: f32[2,4,256], index: 2, kind: input, shape index: {}]
  %s3 = inlined_call_operand.vmem [shape: f32[2,4,256], index: 3, kind: input, shape index: {}]
  %s4 = inlined_call_operand.vmem [shape: bf16[9,4,4], index: 4, kind: input, shape index: {}]
  %s5 = inlined_call_operand.vmem [shape: bf16[9,4,4], index: 5, kind: input, shape index: {}]
  %s6 = inlined_call_operand.vmem [shape: f32[2,4,1], index: 6, kind: input, shape index: {}]
  %s7 = inlined_call_operand.vmem [shape: f32[9,1,256], index: 7, kind: input, shape index: {}]
  %s8 = inlined_call_operand.vmem [shape: f32[2,1,1], index: 8, kind: output, shape index: {}]
  %s9 = sld [smem:[#allocation0]]
  $region69: #{forward.1} parent=0
    _
  %s11 = ssub.s32 1, %s9
  %s12 = scalar_select 0, %s11, %s9
  $region1: #{forward.1} parent=0
    #allocation2 [shape = 'u8[1024]{0}', space=smem, size = 0x400, scoped, tag = 'input window, operand 0, single buffered']
    #allocation3 [shape = 's32[2]{0}', space=sflag, size = 0x8, scoped, tag = 'scoped memory for forward.1']
    %13 = vsyncpa [#allocation3], 0
    loop: start=0, step=1, limit=4
    $region2: #{forward.1} parent=1 // loop_pre_header
      _
    $region3: #{forward.1} parent=1 // loop_header
      %s15 = sphi 0, %s19
      %p16 = scmp.ge.s32.totalorder %s15, 4
      %s23 = sphi 0, %s23
      %s25 = sphi 0, %s23
      %s26 = sphi 0, %s25
      %s40 = sphi 0, %s26
      %s46 = sphi 0, %s48
      %s49 = sphi 0, %s46
      %s50 = sphi 0, %s49
      %s66 = sphi 0, %s50
      %s72 = sphi 0, %s74
      %s75 = sphi 0, %s72
      %s76 = sphi 0, %s75
      %s92 = sphi 0, %s76
      %s98 = sphi 0, %s100
      %s101 = sphi 0, %s98
      %s102 = sphi 0, %s101
      %s118 = sphi 0, %s102
      %s122 = sphi 0, %s122
      %s124 = sphi 0, %s122
      %s125 = sphi 0, %s124
      %s139 = sphi 0, %s125
      %s143 = sphi 0, %s143
      %s145 = sphi 0, %s143
      %s146 = sphi 0, %s145
      %s160 = sphi 0, %s146
      %s166 = sphi 0, %s168
      %s169 = sphi 0, %s166
      %s170 = sphi 0, %s169
      %s186 = sphi 0, %s170
      %s190 = sphi 0, %s190
      %s192 = sphi 0, %s190
      %s193 = sphi 0, %s192
      %s207 = sphi 0, %s193
      %s213 = sphi 0, %s215
      %s216 = sphi 0, %s213
      %s217 = sphi 0, %s216
      %s233 = sphi 0, %s217
    $region4: #{forward.1} parent=1 // loop_header_branch
      %18 = sbr.rel (%p16) target = $region8
    $region5: #{forward.1} parent=1 // loop_body
      %s20 = ssub.s32 %s15, 1
      %s21 = ssub.s32 %s15, 2
      %s22 = sadd.s32 %s15, 1
      %s24 = sadd.s32 %s23, 1
      %p27 = scmp.eq.s32.totalorder %s15, 1
      %p28 = scmp.ne.s32.totalorder %s23, %s25
      %p29 = scmp.eq.s32.totalorder %s15, 0
      %p30 = por %p28, %p29
      %p31 = scmp.ne.s32.totalorder %s23, %s25
      %p32 = scmp.eq.s32.totalorder %s20, 1
      %p33 = por %p31, %p32
      %p34 = scmp.ne.s32.totalorder %s25, %s26
      %p35 = scmp.eq.s32.totalorder %s20, 0
      %p36 = por %p34, %p35
      %p37 = scmp.ne.s32.totalorder %s25, %s26
      %p38 = scmp.eq.s32.totalorder %s21, 1
      %p39 = por %p37, %p38
      %p41 = scmp.ne.s32.totalorder %s26, %s40
      %p42 = scmp.eq.s32.totalorder %s21, 0
      %p43 = por %p41, %p42
      %s44 = ssub.s32 %s15, %s22
      %p45 = scmp.eq.s32.totalorder %s44, 0
      %s47 = sadd.s32 %s46, 1
      %s48 = scalar_select %p45, %s46, %s47
      %p51 = pneg %p45
      %p52 = scmp.eq.s32.totalorder %s15, 1
      %p53 = por %p51, %p52
      %p54 = scmp.ne.s32.totalorder %s46, %s49
      %p55 = scmp.eq.s32.totalorder %s15, 0
      %p56 = por %p54, %p55
      %p57 = scmp.ne.s32.totalorder %s46, %s49
      %p58 = scmp.eq.s32.totalorder %s20, 1
      %p59 = por %p57, %p58
      %p60 = scmp.ne.s32.totalorder %s49, %s50
      %p61 = scmp.eq.s32.totalorder %s20, 0
      %p62 = por %p60, %p61
      %p63 = scmp.ne.s32.totalorder %s49, %s50
      %p64 = scmp.eq.s32.totalorder %s21, 1
      %p65 = por %p63, %p64
      %p67 = scmp.ne.s32.totalorder %s50, %s66
      %p68 = scmp.eq.s32.totalorder %s21, 0
      %p69 = por %p67, %p68
      %s70 = ssub.s32 %s15, %s22
      %p71 = scmp.eq.s32.totalorder %s70, 0
      %s73 = sadd.s32 %s72, 1
      %s74 = scalar_select %p71, %s72, %s73
      %p77 = pneg %p71
      %p78 = scmp.eq.s32.totalorder %s15, 1
      %p79 = por %p77, %p78
      %p80 = scmp.ne.s32.totalorder %s72, %s75
      %p81 = scmp.eq.s32.totalorder %s15, 0
      %p82 = por %p80, %p81
      %p83 = scmp.ne.s32.totalorder %s72, %s75
      %p84 = scmp.eq.s32.totalorder %s20, 1
      %p85 = por %p83, %p84
      %p86 = scmp.ne.s32.totalorder %s75, %s76
      %p87 = scmp.eq.s32.totalorder %s20, 0
      %p88 = por %p86, %p87
      %p89 = scmp.ne.s32.totalorder %s75, %s76
      %p90 = scmp.eq.s32.totalorder %s21, 1
      %p91 = por %p89, %p90
      %p93 = scmp.ne.s32.totalorder %s76, %s92
      %p94 = scmp.eq.s32.totalorder %s21, 0
      %p95 = por %p93, %p94
      %s96 = ssub.s32 %s15, %s22
      %p97 = scmp.eq.s32.totalorder %s96, 0
      %s99 = sadd.s32 %s98, 1
      %s100 = scalar_select %p97, %s98, %s99
      %p103 = pneg %p97
      %p104 = scmp.eq.s32.totalorder %s15, 1
      %p105 = por %p103, %p104
      %p106 = scmp.ne.s32.totalorder %s98, %s101
      %p107 = scmp.eq.s32.totalorder %s15, 0
      %p108 = por %p106, %p107
      %p109 = scmp.ne.s32.totalorder %s98, %s101
      %p110 = scmp.eq.s32.totalorder %s20, 1
      %p111 = por %p109, %p110
      %p112 = scmp.ne.s32.totalorder %s101, %s102
      %p113 = scmp.eq.s32.totalorder %s20, 0
      %p114 = por %p112, %p113
      %p115 = scmp.ne.s32.totalorder %s101, %s102
      %p116 = scmp.eq.s32.totalorder %s21, 1
      %p117 = por %p115, %p116
      %p119 = scmp.ne.s32.totalorder %s102, %s118
      %p120 = scmp.eq.s32.totalorder %s21, 0
      %p121 = por %p119, %p120
      %s123 = sadd.s32 %s122, 1
      %p126 = scmp.eq.s32.totalorder %s15, 1
      %p127 = scmp.ne.s32.totalorder %s122, %s124
      %p128 = scmp.eq.s32.totalorder %s15, 0
      %p129 = por %p127, %p128
      %p130 = scmp.ne.s32.totalorder %s122, %s124
      %p131 = scmp.eq.s32.totalorder %s20, 1
      %p132 = por %p130, %p131
      %p133 = scmp.ne.s32.totalorder %s124, %s125
      %p134 = scmp.eq.s32.totalorder %s20, 0
      %p135 = por %p133, %p134
      %p136 = scmp.ne.s32.totalorder %s124, %s125
      %p137 = scmp.eq.s32.totalorder %s21, 1
      %p138 = por %p136, %p137
      %p140 = scmp.ne.s32.totalorder %s125, %s139
      %p141 = scmp.eq.s32.totalorder %s21, 0
      %p142 = por %p140, %p141
      %s144 = sadd.s32 %s143, 1
      %p147 = scmp.eq.s32.totalorder %s15, 1
      %p148 = scmp.ne.s32.totalorder %s143, %s145
      %p149 = scmp.eq.s32.totalorder %s15, 0
      %p150 = por %p148, %p149
      %p151 = scmp.ne.s32.totalorder %s143, %s145
      %p152 = scmp.eq.s32.totalorder %s20, 1
      %p153 = por %p151, %p152
      %p154 = scmp.ne.s32.totalorder %s145, %s146
      %p155 = scmp.eq.s32.totalorder %s20, 0
      %p156 = por %p154, %p155
      %p157 = scmp.ne.s32.totalorder %s145, %s146
      %p158 = scmp.eq.s32.totalorder %s21, 1
      %p159 = por %p157, %p158
      %p161 = scmp.ne.s32.totalorder %s146, %s160
      %p162 = scmp.eq.s32.totalorder %s21, 0
      %p163 = por %p161, %p162
      %s164 = ssub.s32 %s15, %s22
      %p165 = scmp.eq.s32.totalorder %s164, 0
      %s167 = sadd.s32 %s166, 1
      %s168 = scalar_select %p165, %s166, %s167
      %p171 = pneg %p165
      %p172 = scmp.eq.s32.totalorder %s15, 1
      %p173 = por %p171, %p172
      %p174 = scmp.ne.s32.totalorder %s166, %s169
      %p175 = scmp.eq.s32.totalorder %s15, 0
      %p176 = por %p174, %p175
      %p177 = scmp.ne.s32.totalorder %s166, %s169
      %p178 = scmp.eq.s32.totalorder %s20, 1
      %p179 = por %p177, %p178
      %p180 = scmp.ne.s32.totalorder %s169, %s170
      %p181 = scmp.eq.s32.totalorder %s20, 0
      %p182 = por %p180, %p181
      %p183 = scmp.ne.s32.totalorder %s169, %s170
      %p184 = scmp.eq.s32.totalorder %s21, 1
      %p185 = por %p183, %p184
      %p187 = scmp.ne.s32.totalorder %s170, %s186
      %p188 = scmp.eq.s32.totalorder %s21, 0
      %p189 = por %p187, %p188
      %s191 = sadd.s32 %s190, 1
      %p194 = scmp.eq.s32.totalorder %s15, 1
      %p195 = scmp.ne.s32.totalorder %s190, %s192
      %p196 = scmp.eq.s32.totalorder %s15, 0
      %p197 = por %p195, %p196
      %p198 = scmp.ne.s32.totalorder %s190, %s192
      %p199 = scmp.eq.s32.totalorder %s20, 1
      %p200 = por %p198, %p199
      %p201 = scmp.ne.s32.totalorder %s192, %s193
      %p202 = scmp.eq.s32.totalorder %s20, 0
      %p203 = por %p201, %p202
      %p204 = scmp.ne.s32.totalorder %s192, %s193
      %p205 = scmp.eq.s32.totalorder %s21, 1
      %p206 = por %p204, %p205
      %p208 = scmp.ne.s32.totalorder %s193, %s207
      %p209 = scmp.eq.s32.totalorder %s21, 0
      %p210 = por %p208, %p209
      %s211 = ssub.s32 %s15, %s22
      %p212 = scmp.eq.s32.totalorder %s211, 0
      %s214 = sadd.s32 %s213, 1
      %s215 = scalar_select %p212, %s213, %s214
      %p218 = pneg %p212
      %p219 = scmp.eq.s32.totalorder %s15, 1
      %p220 = por %p218, %p219
      %p221 = scmp.ne.s32.totalorder %s213, %s216
      %p222 = scmp.eq.s32.totalorder %s15, 0
      %p223 = por %p221, %p222
      %p224 = scmp.ne.s32.totalorder %s213, %s216
      %p225 = scmp.eq.s32.totalorder %s20, 1
      %p226 = por %p224, %p225
      %p227 = scmp.ne.s32.totalorder %s216, %s217
      %p228 = scmp.eq.s32.totalorder %s20, 0
      %p229 = por %p227, %p228
      %p230 = scmp.ne.s32.totalorder %s216, %s217
      %p231 = scmp.eq.s32.totalorder %s21, 1
      %p232 = por %p230, %p231
      %p234 = scmp.ne.s32.totalorder %s217, %s233
      %p235 = scmp.eq.s32.totalorder %s21, 0
      %p236 = por %p234, %p235
      %p237 = scmp.le.s32.totalorder 1, %s15
      %p238 = scmp.lt.s32.totalorder %s15, 3
      %p239 = pnand %p237, %p238
      %p240 = pneg %p239
      // Predicated region
      $region9: #{forward.1} parent=5 // pred_check
        _
      $region10: #{forward.1} parent=5 // pred_check_branch
        %242 = sbr.rel (%p239) target = $region12
      $region11: #{forward.1} parent=5 // pred_region
        %s243 = ssub.s32 %s15, 1
        // Predicated region
        $region13: #{forward.1} parent=11 // pred_check
          %p244 = pneg %p36
        $region14: #{forward.1} parent=11 // pred_check_branch
          %246 = sbr.rel (%p244) target = $region16
        $region15: #{forward.1} parent=11 // pred_region
          %s248 = ssub.s32 32, 32
          %249 = vsyncadd [#allocation3], %s248
          %s251 = sshll.u32 %s0, 4
          %s252 = int_to_ptr.vmem [resolvable:$true] %s251
          %254 = dma.vmem_to_smem %s252, 32, [#allocation2], [#allocation3]
        $region16: #{forward.1} parent=11 // pred_fallthru
          _
        // Predicated region
        $region17: #{forward.1} parent=11 // pred_check
          %p255 = pneg %p135
        $region18: #{forward.1} parent=11 // pred_check_branch
          %257 = sbr.rel (%p255) target = $region20
        $region19: #{forward.1} parent=11 // pred_region
          _
        $region20: #{forward.1} parent=11 // pred_fallthru
          _
        // Predicated region
        $region21: #{forward.1} parent=11 // pred_check
          %p258 = pneg %p156
        $region22: #{forward.1} parent=11 // pred_check_branch
          %260 = sbr.rel (%p258) target = $region24
        $region23: #{forward.1} parent=11 // pred_region
          _
        $region24: #{forward.1} parent=11 // pred_fallthru
          _
        // Predicated region
        $region25: #{forward.1} parent=11 // pred_check
          %p261 = pneg %p203
        $region26: #{forward.1} parent=11 // pred_check_branch
          %263 = sbr.rel (%p261) target = $region28
        $region27: #{forward.1} parent=11 // pred_region
          _
        $region28: #{forward.1} parent=11 // pred_fallthru
          _
      $region12: #{forward.1} parent=5 // pred_fallthru
        _
      %p264 = scmp.lt.s32.totalorder %s15, 2
      // Predicated region
      $region29: #{forward.1} parent=5 // pred_check
        %p265 = pneg %p264
      $region30: #{forward.1} parent=5 // pred_check_branch
        %267 = sbr.rel (%p265) target = $region32
      $region31: #{forward.1} parent=5 // pred_region
        // Predicated region
        $region33: #{forward.1} parent=31 // pred_check
          %p268 = pneg %p56
        $region34: #{forward.1} parent=31 // pred_check_branch
          %270 = sbr.rel (%p268) target = $region36
        $region35: #{forward.1} parent=31 // pred_region
          %p271 = scmp.lt.s32.totalorder %s15, 1
          %s272 = scalar_select %p271, %s15, 1
          %s273 = smul.addr %s272, 2
          %s274 = smul.addr %s273, 4
          %s275 = scalar_lea.vmem %s1, %s274
        $region36: #{forward.1} parent=31 // pred_fallthru
          _
        // Predicated region
        $region37: #{forward.1} parent=31 // pred_check
          %p276 = pneg %p82
        $region38: #{forward.1} parent=31 // pred_check_branch
          %278 = sbr.rel (%p276) target = $region40
        $region39: #{forward.1} parent=31 // pred_region
          %p279 = scmp.lt.s32.totalorder %s15, 1
          %s280 = scalar_select %p279, %s15, 1
          %s281 = smul.addr %s280, 2
          %s282 = smul.addr %s281, 4
          %s283 = scalar_lea.vmem %s2, %s282
        $region40: #{forward.1} parent=31 // pred_fallthru
          _
        // Predicated region
        $region41: #{forward.1} parent=31 // pred_check
          %p284 = pneg %p108
        $region42: #{forward.1} parent=31 // pred_check_branch
          %286 = sbr.rel (%p284) target = $region44
        $region43: #{forward.1} parent=31 // pred_region
          %p287 = scmp.lt.s32.totalorder %s15, 1
          %s288 = scalar_select %p287, %s15, 1
          %s289 = smul.addr %s288, 2
          %s290 = smul.addr %s289, 4
          %s291 = scalar_lea.vmem %s3, %s290
        $region44: #{forward.1} parent=31 // pred_fallthru
          _
        // Predicated region
        $region45: #{forward.1} parent=31 // pred_check
          %p292 = pneg %p176
        $region46: #{forward.1} parent=31 // pred_check_branch
          %294 = sbr.rel (%p292) target = $region48
        $region47: #{forward.1} parent=31 // pred_region
          %p295 = scmp.lt.s32.totalorder %s15, 1
          %s296 = scalar_select %p295, %s15, 1
          %s297 = smul.addr %s296, 4
          %s298 = scalar_lea.vmem %s6, %s297
        $region48: #{forward.1} parent=31 // pred_fallthru
          _
      $region32: #{forward.1} parent=5 // pred_fallthru
        _
      %p299 = scmp.le.s32.totalorder 1, %s15
      %p300 = scmp.lt.s32.totalorder %s15, 3
      %p301 = pnand %p299, %p300
      %p302 = pneg %p301
      // Predicated region
      $region49: #{forward.1} parent=5 // pred_check
        _
      $region50: #{forward.1} parent=5 // pred_check_branch
        %304 = sbr.rel (%p301) target = $region52
      $region51: #{forward.1} parent=5 // pred_region
        %s305 = ssub.s32 %s15, 1
        // Predicated region
        $region53: #{forward.1} parent=51 // pred_check
          %p306 = pneg %p36
        $region54: #{forward.1} parent=51 // pred_check_branch
          %308 = sbr.rel (%p306) target = $region56
        $region55: #{forward.1} parent=51 // pred_region
          %309 = dma.done [#allocation3], 32
        $region56: #{forward.1} parent=51 // pred_fallthru
          _
        %310 = sfence
        %p311 = pneg %p36
        %p312 = pneg %p33
        %p313 = scmp.lt.s32.totalorder %s20, 1
        %s314 = scalar_select %p313, %s20, 1
        %s315 = smul.addr %s314, 2
        %s316 = smul.addr %s315, 4
        %s317 = scalar_lea.vmem %s1, %s316
        %p318 = pneg %p62
        %p319 = pneg %p59
        %p320 = scmp.lt.s32.totalorder %s20, 1
        %s321 = scalar_select %p320, %s20, 1
        %s322 = smul.addr %s321, 2
        %s323 = smul.addr %s322, 4
        %s324 = scalar_lea.vmem %s2, %s323
        %p325 = pneg %p88
        %p326 = pneg %p85
        %p327 = scmp.lt.s32.totalorder %s20, 1
        %s328 = scalar_select %p327, %s20, 1
        %s329 = smul.addr %s328, 2
        %s330 = smul.addr %s329, 4
        %s331 = scalar_lea.vmem %s3, %s330
        %p332 = pneg %p114
        %p333 = pneg %p111
        %p334 = pneg %p135
        %p335 = pneg %p132
        %p336 = pneg %p156
        %p337 = pneg %p153
        %p338 = scmp.lt.s32.totalorder %s20, 1
        %s339 = scalar_select %p338, %s20, 1
        %s340 = smul.addr %s339, 4
        %s341 = scalar_lea.vmem %s6, %s340
        %p342 = pneg %p182
        %p343 = pneg %p179
        %p344 = pneg %p203
        %p345 = pneg %p200
        %p346 = pneg %p229
        %p347 = pneg %p226
        %p348 = scmp.lt.s32.totalorder %s20, 1
        %s349 = scalar_select %p348, %s20, 1
        %s350 = scalar_lea.vmem %s8, %s349
        %p351 = scmp.lt.s32.totalorder %s20, 1
        %s352 = scalar_select %p351, %s20, 1
        %s353 = smul.addr %s352, 2
        %s354 = smul.addr %s353, 4
        %s355 = scalar_lea.vmem %s1, %s354
        %p356 = scmp.lt.s32.totalorder %s20, 1
        %s357 = scalar_select %p356, %s20, 1
        %s358 = smul.addr %s357, 2
        %s359 = smul.addr %s358, 4
        %s360 = scalar_lea.vmem %s2, %s359
        %p361 = scmp.lt.s32.totalorder %s20, 1
        %s362 = scalar_select %p361, %s20, 1
        %s363 = smul.addr %s362, 2
        %s364 = smul.addr %s363, 4
        %s365 = scalar_lea.vmem %s3, %s364
        %p366 = scmp.lt.s32.totalorder %s20, 1
        %s367 = scalar_select %p366, %s20, 1
        %s368 = smul.addr %s367, 4
        %s369 = scalar_lea.vmem %s6, %s368
        %p370 = scmp.lt.s32.totalorder %s20, 1
        %s371 = scalar_select %p370, %s20, 1
        %s372 = scalar_lea.vmem %s8, %s371
        %s374 = smul.u32 %s20, 128
        %s375 = sld [smem:[#allocation2 + %s374]]
        %s376 = sadd.s32 %s374, 1
        %s377 = sld [smem:[#allocation2 + %s376]]
        %v378 = vld [vmem:[%s365] sm:$0xff]
        %v379 = vld [vmem:[%s360] sm:$0xff]
        %v380 = vstv %s375
        %v381 = vmul.f32 %v380, %v379
        %v382 = vstv %s377
        %v383 = vmul.f32 %v382, %v378
        %v384 = vadd.f32 %v381, %v383
        %v385 = vld [vmem:[%s355] sm:$0xff]
        %v386 = vld [vmem:[%s7] sm:$0x3]
        %v388 = vcombine.high %v384, %v384
        %390 = vrot.lane.b32.xlu0 %v384, 17
        %v391 = vpop.permute.xlu0 %390
        %392 = vrot.lane.b32.xlu0 %v388, 17
        %v393 = vpop.permute.xlu0 %392
        %v394 = vlaneseq
        %v395 = vand.u32 %v394, 127
        %vm396 = vcmp.lt.s32.totalorder %v395, 17
        %v397 = vsel %vm396, %v391, %v393
        %v398 = vsel %vm396, %v393, %v391
        %v400 = vlaneseq
        %v401 = vshrl.u32 %v400, 7
        %v402 = vsub.s32 0, %v401
        %v403 = vrot.slane %v386, %v402
        %v404 = vlaneseq
        %v405 = vshrl.u32 %v404, 7
        %v406 = vsub.s32 1, %v405
        %v407 = vrot.slane %v386, %v406
        %v410 = vmul.f32 %v398, %v403
        %v411 = vmul.f32 %v397, %v407
        %v413 = vcombine.high %v385, %v385
        %415 = vrot.lane.b32.xlu0 %v385, 17
        %v416 = vpop.permute.xlu0 %415
        %417 = vrot.lane.b32.xlu0 %v413, 17
        %v418 = vpop.permute.xlu0 %417
        %v419 = vsel %vm396, %v416, %v418
        %v420 = vsel %vm396, %v418, %v416
        %v421 = vmul.f32 %v420, %v403
        %v422 = vmul.f32 %v419, %v407
        %v423 = vld [vmem:[%s5] sm:$0x3]
        %v424 = vpack.c.bf16 %v410, %v410
        %v425 = vpack.c.bf16 %v411, %v411
        %v426 = vld [vmem:[%s4] sm:$0x3]
        %v427 = vpack.c.bf16 %v421, %v421
        %v428 = vpack.c.bf16 %v422, %v422
        %vm429 = vcmask 31744
        %v431 = vsel %vm429, %v426, 0
        %vm433 = vcmask 1041408
        %v435 = vsel %vm433, %v427, 0
        %v438 = vsel %vm433, %v428, 0
        %440 = vmatprep.subr.bf16.mxu0 %v438
        %441 = vmatpush1.bf16.msra.mxu0 %v435
        %442 = vmatprep.subr.bf16.mxu0 0
        %443 = vmatpush1.bf16.msra.mxu0 0
        %444 = vmatprep.subr.bf16.mxu0 0
        %445 = vmatpush1.bf16.msra.mxu0 0
        %446 = vmatprep.subr.bf16.mxu0 0
        %447 = vmatpush1.bf16.msra.mxu0 0
        %448 = vmatprep.subr.bf16.mxu0 0
        %449 = vmatpush1.bf16.msra.mxu0 0
        %450 = vmatprep.subr.bf16.mxu0 0
        %451 = vmatpush1.bf16.msra.mxu0 0
        %452 = vmatprep.subr.bf16.mxu0 0
        %453 = vmatpush1.bf16.msra.mxu0 0
        %454 = vmatprep.subr.bf16.mxu0 0
        %455 = vmatpush1.bf16.msra.mxu0 0
        %456 = vmatprep.subr.bf16.mxu0 0
        %457 = vmatpush1.bf16.msra.mxu0 0
        %458 = vmatprep.subr.bf16.mxu0 0
        %459 = vmatpush1.bf16.msra.mxu0 0
        %460 = vmatprep.subr.bf16.mxu0 0
        %461 = vmatpush1.bf16.msra.mxu0 0
        %462 = vmatprep.subr.bf16.mxu0 0
        %463 = vmatpush1.bf16.msra.mxu0 0
        %464 = vmatprep.subr.bf16.mxu0 0
        %465 = vmatpush1.bf16.msra.mxu0 0
        %466 = vmatprep.subr.bf16.mxu0 0
        %467 = vmatpush1.bf16.msra.mxu0 0
        %468 = vmatprep.subr.bf16.mxu0 0
        %469 = vmatpush1.bf16.msra.mxu0 0
        %470 = vmatprep.subr.bf16.mxu0 0
        %471 = vmatpush1.bf16.msra.mxu0 0
        %472 = vmatprep.mubr.bf16.mxu0 0
        %473 = vmatmul.mubr.bf16.gmra.mrb[0].mxu0 %v431
        %v474 = vpop.f32.mrb[0].mxu0
        %v475 = vadd.f32 0.0, %v474
        %v476 = vpop.f32.mrb[0].mxu0
        %v477 = vadd.f32 0.0, %v476
        %v478 = vpop.f32.mrb[0].mxu0
        %v479 = vpop.f32.mrb[0].mxu0
        %480 = vdwg.mxu0
        %v482 = vsel %vm429, %v423, 0
        %v485 = vsel %vm433, %v424, 0
        %v488 = vsel %vm433, %v425, 0
        %490 = vmatprep.subr.bf16.mxu0 %v488
        %491 = vmatpush1.bf16.msra.mxu0 %v485
        %492 = vmatprep.subr.bf16.mxu0 0
        %493 = vmatpush1.bf16.msra.mxu0 0
        %494 = vmatprep.subr.bf16.mxu0 0
        %495 = vmatpush1.bf16.msra.mxu0 0
        %496 = vmatprep.subr.bf16.mxu0 0
        %497 = vmatpush1.bf16.msra.mxu0 0
        %498 = vmatprep.subr.bf16.mxu0 0
        %499 = vmatpush1.bf16.msra.mxu0 0
        %500 = vmatprep.subr.bf16.mxu0 0
        %501 = vmatpush1.bf16.msra.mxu0 0
        %502 = vmatprep.subr.bf16.mxu0 0
        %503 = vmatpush1.bf16.msra.mxu0 0
        %504 = vmatprep.subr.bf16.mxu0 0
        %505 = vmatpush1.bf16.msra.mxu0 0
        %506 = vmatprep.subr.bf16.mxu0 0
        %507 = vmatpush1.bf16.msra.mxu0 0
        %508 = vmatprep.subr.bf16.mxu0 0
        %509 = vmatpush1.bf16.msra.mxu0 0
        %510 = vmatprep.subr.bf16.mxu0 0
        %511 = vmatpush1.bf16.msra.mxu0 0
        %512 = vmatprep.subr.bf16.mxu0 0
        %513 = vmatpush1.bf16.msra.mxu0 0
        %514 = vmatprep.subr.bf16.mxu0 0
        %515 = vmatpush1.bf16.msra.mxu0 0
        %516 = vmatprep.subr.bf16.mxu0 0
        %517 = vmatpush1.bf16.msra.mxu0 0
        %518 = vmatprep.subr.bf16.mxu0 0
        %519 = vmatpush1.bf16.msra.mxu0 0
        %520 = vmatprep.subr.bf16.mxu0 0
        %521 = vmatpush1.bf16.msra.mxu0 0
        %522 = vmatprep.mubr.bf16.mxu0 0
        %523 = vmatmul.mubr.bf16.gmra.mrb[0].mxu0 %v482
        %v524 = vpop.f32.mrb[0].mxu0
        %v525 = vadd.f32 %v475, %v524
        %v526 = vpop.f32.mrb[0].mxu0
        %v527 = vadd.f32 %v477, %v526
        %v528 = vpop.f32.mrb[0].mxu0
        %v529 = vpop.f32.mrb[0].mxu0
        %530 = vdwg.mxu0
        %s531 = scalar_lea.vmem %s7, 2
        %v532 = vld [vmem:[%s531] sm:$0x3]
        %533 = vrot.lane.b32.xlu0 %v384, 16
        %v534 = vpop.permute.xlu0 %533
        %535 = vrot.lane.b32.xlu0 %v388, 16
        %v536 = vpop.permute.xlu0 %535
        %vm537 = vcmp.lt.s32.totalorder %v395, 16
        %v538 = vsel %vm537, %v534, %v536
        %v539 = vsel %vm537, %v536, %v534
        %v541 = vlaneseq
        %v542 = vshrl.u32 %v541, 7
        %v543 = vsub.s32 0, %v542
        %v544 = vrot.slane %v532, %v543
        %v545 = vlaneseq
        %v546 = vshrl.u32 %v545, 7
        %v547 = vsub.s32 1, %v546
        %v548 = vrot.slane %v532, %v547
        %v551 = vmul.f32 %v539, %v544
        %v552 = vmul.f32 %v538, %v548
        %553 = vrot.lane.b32.xlu0 %v385, 16
        %v554 = vpop.permute.xlu0 %553
        %555 = vrot.lane.b32.xlu0 %v413, 16
        %v556 = vpop.permute.xlu0 %555
        %v557 = vsel %vm537, %v554, %v556
        %v558 = vsel %vm537, %v556, %v554
        %v559 = vmul.f32 %v558, %v544
        %v560 = vmul.f32 %v557, %v548
        %s561 = scalar_lea.vmem %s5, 2
        %v562 = vld [vmem:[%s561] sm:$0x3]
        %v563 = vpack.c.bf16 %v551, %v551
        %v564 = vpack.c.bf16 %v552, %v552
        %v566 = vsel %vm429, %v562, 0
        %v569 = vsel %vm433, %v563, 0
        %v572 = vsel %vm433, %v564, 0
        %574 = vmatprep.subr.bf16.mxu0 %v572
        %575 = vmatpush1.bf16.msra.mxu0 %v569
        %576 = vmatprep.subr.bf16.mxu0 0
        %577 = vmatpush1.bf16.msra.mxu0 0
        %578 = vmatprep.subr.bf16.mxu0 0
        %579 = vmatpush1.bf16.msra.mxu0 0
        %580 = vmatprep.subr.bf16.mxu0 0
        %581 = vmatpush1.bf16.msra.mxu0 0
        %582 = vmatprep.subr.bf16.mxu0 0
        %583 = vmatpush1.bf16.msra.mxu0 0
        %584 = vmatprep.subr.bf16.mxu0 0
        %585 = vmatpush1.bf16.msra.mxu0 0
        %586 = vmatprep.subr.bf16.mxu0 0
        %587 = vmatpush1.bf16.msra.mxu0 0
        %588 = vmatprep.subr.bf16.mxu0 0
        %589 = vmatpush1.bf16.msra.mxu0 0
        %590 = vmatprep.subr.bf16.mxu0 0
        %591 = vmatpush1.bf16.msra.mxu0 0
        %592 = vmatprep.subr.bf16.mxu0 0
        %593 = vmatpush1.bf16.msra.mxu0 0
        %594 = vmatprep.subr.bf16.mxu0 0
        %595 = vmatpush1.bf16.msra.mxu0 0
        %596 = vmatprep.subr.bf16.mxu0 0
        %597 = vmatpush1.bf16.msra.mxu0 0
        %598 = vmatprep.subr.bf16.mxu0 0
        %599 = vmatpush1.bf16.msra.mxu0 0
        %600 = vmatprep.subr.bf16.mxu0 0
        %601 = vmatpush1.bf16.msra.mxu0 0
        %602 = vmatprep.subr.bf16.mxu0 0
        %603 = vmatpush1.bf16.msra.mxu0 0
        %604 = vmatprep.subr.bf16.mxu0 0
        %605 = vmatpush1.bf16.msra.mxu0 0
        %606 = vmatprep.mubr.bf16.mxu0 0
        %607 = vmatmul.mubr.bf16.gmra.mrb[0].mxu0 %v566
        %v608 = vpop.f32.mrb[0].mxu0
        %v609 = vadd.f32 0.0, %v608
        %v610 = vpop.f32.mrb[0].mxu0
        %v611 = vadd.f32 0.0, %v610
        %v612 = vpop.f32.mrb[0].mxu0
        %v613 = vpop.f32.mrb[0].mxu0
        %614 = vdwg.mxu0
        %v615 = vadd.f32 %v525, %v609
        %v616 = vadd.f32 %v527, %v611
        %s617 = scalar_lea.vmem %s4, 2
        %v618 = vld [vmem:[%s617] sm:$0x3]
        %v619 = vpack.c.bf16 %v559, %v559
        %v620 = vpack.c.bf16 %v560, %v560
        %v622 = vsel %vm429, %v618, 0
        %v625 = vsel %vm433, %v619, 0
        %v628 = vsel %vm433, %v620, 0
        %630 = vmatprep.subr.bf16.mxu0 %v628
        %631 = vmatpush1.bf16.msra.mxu0 %v625
        %632 = vmatprep.subr.bf16.mxu0 0
        %633 = vmatpush1.bf16.msra.mxu0 0
        %634 = vmatprep.subr.bf16.mxu0 0
        %635 = vmatpush1.bf16.msra.mxu0 0
        %636 = vmatprep.subr.bf16.mxu0 0
        %637 = vmatpush1.bf16.msra.mxu0 0
        %638 = vmatprep.subr.bf16.mxu0 0
        %639 = vmatpush1.bf16.msra.mxu0 0
        %640 = vmatprep.subr.bf16.mxu0 0
        %641 = vmatpush1.bf16.msra.mxu0 0
        %642 = vmatprep.subr.bf16.mxu0 0
        %643 = vmatpush1.bf16.msra.mxu0 0
        %644 = vmatprep.subr.bf16.mxu0 0
        %645 = vmatpush1.bf16.msra.mxu0 0
        %646 = vmatprep.subr.bf16.mxu0 0
        %647 = vmatpush1.bf16.msra.mxu0 0
        %648 = vmatprep.subr.bf16.mxu0 0
        %649 = vmatpush1.bf16.msra.mxu0 0
        %650 = vmatprep.subr.bf16.mxu0 0
        %651 = vmatpush1.bf16.msra.mxu0 0
        %652 = vmatprep.subr.bf16.mxu0 0
        %653 = vmatpush1.bf16.msra.mxu0 0
        %654 = vmatprep.subr.bf16.mxu0 0
        %655 = vmatpush1.bf16.msra.mxu0 0
        %656 = vmatprep.subr.bf16.mxu0 0
        %657 = vmatpush1.bf16.msra.mxu0 0
        %658 = vmatprep.subr.bf16.mxu0 0
        %659 = vmatpush1.bf16.msra.mxu0 0
        %660 = vmatprep.subr.bf16.mxu0 0
        %661 = vmatpush1.bf16.msra.mxu0 0
        %662 = vmatprep.mubr.bf16.mxu0 0
        %663 = vmatmul.mubr.bf16.gmra.mrb[0].mxu0 %v622
        %v664 = vpop.f32.mrb[0].mxu0
        %v665 = vadd.f32 0.0, %v664
        %v666 = vpop.f32.mrb[0].mxu0
        %v667 = vadd.f32 0.0, %v666
        %v668 = vpop.f32.mrb[0].mxu0
        %v669 = vpop.f32.mrb[0].mxu0
        %670 = vdwg.mxu0
        %v671 = vadd.f32 %v615, %v665
        %v672 = vadd.f32 %v616, %v667
        %s673 = scalar_lea.vmem %s7, 4
        %v674 = vld [vmem:[%s673] sm:$0x3]
        %675 = vrot.lane.b32.xlu0 %v384, 15
        %v676 = vpop.permute.xlu0 %675
        %677 = vrot.lane.b32.xlu0 %v388, 15
        %v678 = vpop.permute.xlu0 %677
        %vm679 = vcmp.lt.s32.totalorder %v395, 15
        %v680 = vsel %vm679, %v676, %v678
        %v681 = vsel %vm679, %v678, %v676
        %v683 = vlaneseq
        %v684 = vshrl.u32 %v683, 7
        %v685 = vsub.s32 0, %v684
        %v686 = vrot.slane %v674, %v685
        %v687 = vlaneseq
        %v688 = vshrl.u32 %v687, 7
        %v689 = vsub.s32 1, %v688
        %v690 = vrot.slane %v674, %v689
        %v693 = vmul.f32 %v681, %v686
        %v694 = vmul.f32 %v680, %v690
        %695 = vrot.lane.b32.xlu0 %v385, 15
        %v696 = vpop.permute.xlu0 %695
        %697 = vrot.lane.b32.xlu0 %v413, 15
        %v698 = vpop.permute.xlu0 %697
        %v699 = vsel %vm679, %v696, %v698
        %v700 = vsel %vm679, %v698, %v696
        %v701 = vmul.f32 %v700, %v686
        %v702 = vmul.f32 %v699, %v690
        %s703 = scalar_lea.vmem %s5, 4
        %v704 = vld [vmem:[%s703] sm:$0x3]
        %v705 = vpack.c.bf16 %v693, %v693
        %v706 = vpack.c.bf16 %v694, %v694
        %v708 = vsel %vm429, %v704, 0
        %v711 = vsel %vm433, %v705, 0
        %v714 = vsel %vm433, %v706, 0
        %716 = vmatprep.subr.bf16.mxu0 %v714
        %717 = vmatpush1.bf16.msra.mxu0 %v711
        %718 = vmatprep.subr.bf16.mxu0 0
        %719 = vmatpush1.bf16.msra.mxu0 0
        %720 = vmatprep.subr.bf16.mxu0 0
        %721 = vmatpush1.bf16.msra.mxu0 0
        %722 = vmatprep.subr.bf16.mxu0 0
        %723 = vmatpush1.bf16.msra.mxu0 0
        %724 = vmatprep.subr.bf16.mxu0 0
        %725 = vmatpush1.bf16.msra.mxu0 0
        %726 = vmatprep.subr.bf16.mxu0 0
        %727 = vmatpush1.bf16.msra.mxu0 0
        %728 = vmatprep.subr.bf16.mxu0 0
        %729 = vmatpush1.bf16.msra.mxu0 0
        %730 = vmatprep.subr.bf16.mxu0 0
        %731 = vmatpush1.bf16.msra.mxu0 0
        %732 = vmatprep.subr.bf16.mxu0 0
        %733 = vmatpush1.bf16.msra.mxu0 0
        %734 = vmatprep.subr.bf16.mxu0 0
        %735 = vmatpush1.bf16.msra.mxu0 0
        %736 = vmatprep.subr.bf16.mxu0 0
        %737 = vmatpush1.bf16.msra.mxu0 0
        %738 = vmatprep.subr.bf16.mxu0 0
        %739 = vmatpush1.bf16.msra.mxu0 0
        %740 = vmatprep.subr.bf16.mxu0 0
        %741 = vmatpush1.bf16.msra.mxu0 0
        %742 = vmatprep.subr.bf16.mxu0 0
        %743 = vmatpush1.bf16.msra.mxu0 0
        %744 = vmatprep.subr.bf16.mxu0 0
        %745 = vmatpush1.bf16.msra.mxu0 0
        %746 = vmatprep.subr.bf16.mxu0 0
        %747 = vmatpush1.bf16.msra.mxu0 0
        %748 = vmatprep.mubr.bf16.mxu0 0
        %749 = vmatmul.mubr.bf16.gmra.mrb[0].mxu0 %v708
        %v750 = vpop.f32.mrb[0].mxu0
        %v751 = vadd.f32 0.0, %v750
        %v752 = vpop.f32.mrb[0].mxu0
        %v753 = vadd.f32 0.0, %v752
        %v754 = vpop.f32.mrb[0].mxu0
        %v755 = vpop.f32.mrb[0].mxu0
        %756 = vdwg.mxu0
        %v757 = vadd.f32 %v671, %v751
        %v758 = vadd.f32 %v672, %v753
        %s759 = scalar_lea.vmem %s4, 4
        %v760 = vld [vmem:[%s759] sm:$0x3]
        %v761 = vpack.c.bf16 %v701, %v701
        %v762 = vpack.c.bf16 %v702, %v702
        %v764 = vsel %vm429, %v760, 0
        %v767 = vsel %vm433, %v761, 0
        %v770 = vsel %vm433, %v762, 0
        %772 = vmatprep.subr.bf16.mxu0 %v770
        %773 = vmatpush1.bf16.msra.mxu0 %v767
        %774 = vmatprep.subr.bf16.mxu0 0
        %775 = vmatpush1.bf16.msra.mxu0 0
        %776 = vmatprep.subr.bf16.mxu0 0
        %777 = vmatpush1.bf16.msra.mxu0 0
        %778 = vmatprep.subr.bf16.mxu0 0
        %779 = vmatpush1.bf16.msra.mxu0 0
        %780 = vmatprep.subr.bf16.mxu0 0
        %781 = vmatpush1.bf16.msra.mxu0 0
        %782 = vmatprep.subr.bf16.mxu0 0
        %783 = vmatpush1.bf16.msra.mxu0 0
        %784 = vmatprep.subr.bf16.mxu0 0
        %785 = vmatpush1.bf16.msra.mxu0 0
        %786 = vmatprep.subr.bf16.mxu0 0
        %787 = vmatpush1.bf16.msra.mxu0 0
        %788 = vmatprep.subr.bf16.mxu0 0
        %789 = vmatpush1.bf16.msra.mxu0 0
        %790 = vmatprep.subr.bf16.mxu0 0
        %791 = vmatpush1.bf16.msra.mxu0 0
        %792 = vmatprep.subr.bf16.mxu0 0
        %793 = vmatpush1.bf16.msra.mxu0 0
        %794 = vmatprep.subr.bf16.mxu0 0
        %795 = vmatpush1.bf16.msra.mxu0 0
        %796 = vmatprep.subr.bf16.mxu0 0
        %797 = vmatpush1.bf16.msra.mxu0 0
        %798 = vmatprep.subr.bf16.mxu0 0
        %799 = vmatpush1.bf16.msra.mxu0 0
        %800 = vmatprep.subr.bf16.mxu0 0
        %801 = vmatpush1.bf16.msra.mxu0 0
        %802 = vmatprep.subr.bf16.mxu0 0
        %803 = vmatpush1.bf16.msra.mxu0 0
        %804 = vmatprep.mubr.bf16.mxu0 0
        %805 = vmatmul.mubr.bf16.gmra.mrb[0].mxu0 %v764
        %v806 = vpop.f32.mrb[0].mxu0
        %v807 = vadd.f32 0.0, %v806
        %v808 = vpop.f32.mrb[0].mxu0
        %v809 = vadd.f32 0.0, %v808
        %v810 = vpop.f32.mrb[0].mxu0
        %v811 = vpop.f32.mrb[0].mxu0
        %812 = vdwg.mxu0
        %v813 = vadd.f32 %v757, %v807
        %v814 = vadd.f32 %v758, %v809
        %s815 = scalar_lea.vmem %s7, 6
        %v816 = vld [vmem:[%s815] sm:$0x3]
        %817 = vrot.lane.b32.xlu0 %v384, 1
        %v818 = vpop.permute.xlu0 %817
        %819 = vrot.lane.b32.xlu0 %v388, 1
        %v820 = vpop.permute.xlu0 %819
        %vm821 = vcmp.lt.s32.totalorder %v395, 1
        %v822 = vsel %vm821, %v818, %v820
        %v823 = vsel %vm821, %v820, %v818
        %v825 = vlaneseq
        %v826 = vshrl.u32 %v825, 7
        %v827 = vsub.s32 0, %v826
        %v828 = vrot.slane %v816, %v827
        %v829 = vlaneseq
        %v830 = vshrl.u32 %v829, 7
        %v831 = vsub.s32 1, %v830
        %v832 = vrot.slane %v816, %v831
        %v835 = vmul.f32 %v823, %v828
        %v836 = vmul.f32 %v822, %v832
        %837 = vrot.lane.b32.xlu0 %v385, 1
        %v838 = vpop.permute.xlu0 %837
        %839 = vrot.lane.b32.xlu0 %v413, 1
        %v840 = vpop.permute.xlu0 %839
        %v841 = vsel %vm821, %v838, %v840
        %v842 = vsel %vm821, %v840, %v838
        %v843 = vmul.f32 %v842, %v828
        %v844 = vmul.f32 %v841, %v832
        %s845 = scalar_lea.vmem %s5, 6
        %v846 = vld [vmem:[%s845] sm:$0x3]
        %v847 = vpack.c.bf16 %v835, %v835
        %v848 = vpack.c.bf16 %v836, %v836
        %v850 = vsel %vm429, %v846, 0
        %v853 = vsel %vm433, %v847, 0
        %v856 = vsel %vm433, %v848, 0
        %858 = vmatprep.subr.bf16.mxu0 %v856
        %859 = vmatpush1.bf16.msra.mxu0 %v853
        %860 = vmatprep.subr.bf16.mxu0 0
        %861 = vmatpush1.bf16.msra.mxu0 0
        %862 = vmatprep.subr.bf16.mxu0 0
        %863 = vmatpush1.bf16.msra.mxu0 0
        %864 = vmatprep.subr.bf16.mxu0 0
        %865 = vmatpush1.bf16.msra.mxu0 0
        %866 = vmatprep.subr.bf16.mxu0 0
        %867 = vmatpush1.bf16.msra.mxu0 0
        %868 = vmatprep.subr.bf16.mxu0 0
        %869 = vmatpush1.bf16.msra.mxu0 0
        %870 = vmatprep.subr.bf16.mxu0 0
        %871 = vmatpush1.bf16.msra.mxu0 0
        %872 = vmatprep.subr.bf16.mxu0 0
        %873 = vmatpush1.bf16.msra.mxu0 0
        %874 = vmatprep.subr.bf16.mxu0 0
        %875 = vmatpush1.bf16.msra.mxu0 0
        %876 = vmatprep.subr.bf16.mxu0 0
        %877 = vmatpush1.bf16.msra.mxu0 0
        %878 = vmatprep.subr.bf16.mxu0 0
        %879 = vmatpush1.bf16.msra.mxu0 0
        %880 = vmatprep.subr.bf16.mxu0 0
        %881 = vmatpush1.bf16.msra.mxu0 0
        %882 = vmatprep.subr.bf16.mxu0 0
        %883 = vmatpush1.bf16.msra.mxu0 0
        %884 = vmatprep.subr.bf16.mxu0 0
        %885 = vmatpush1.bf16.msra.mxu0 0
        %886 = vmatprep.subr.bf16.mxu0 0
        %887 = vmatpush1.bf16.msra.mxu0 0
        %888 = vmatprep.subr.bf16.mxu0 0
        %889 = vmatpush1.bf16.msra.mxu0 0
        %890 = vmatprep.mubr.bf16.mxu0 0
        %891 = vmatmul.mubr.bf16.gmra.mrb[0].mxu0 %v850
        %v892 = vpop.f32.mrb[0].mxu0
        %v893 = vadd.f32 0.0, %v892
        %v894 = vpop.f32.mrb[0].mxu0
        %v895 = vadd.f32 0.0, %v894
        %v896 = vpop.f32.mrb[0].mxu0
        %v897 = vpop.f32.mrb[0].mxu0
        %898 = vdwg.mxu0
        %v899 = vadd.f32 %v813, %v893
        %v900 = vadd.f32 %v814, %v895
        %s901 = scalar_lea.vmem %s4, 6
        %v902 = vld [vmem:[%s901] sm:$0x3]
        %v903 = vpack.c.bf16 %v843, %v843
        %v904 = vpack.c.bf16 %v844, %v844
        %v906 = vsel %vm429, %v902, 0
        %v909 = vsel %vm433, %v903, 0
        %v912 = vsel %vm433, %v904, 0
        %914 = vmatprep.subr.bf16.mxu0 %v912
        %915 = vmatpush1.bf16.msra.mxu0 %v909
        %916 = vmatprep.subr.bf16.mxu0 0
        %917 = vmatpush1.bf16.msra.mxu0 0
        %918 = vmatprep.subr.bf16.mxu0 0
        %919 = vmatpush1.bf16.msra.mxu0 0
        %920 = vmatprep.subr.bf16.mxu0 0
        %921 = vmatpush1.bf16.msra.mxu0 0
        %922 = vmatprep.subr.bf16.mxu0 0
        %923 = vmatpush1.bf16.msra.mxu0 0
        %924 = vmatprep.subr.bf16.mxu0 0
        %925 = vmatpush1.bf16.msra.mxu0 0
        %926 = vmatprep.subr.bf16.mxu0 0
        %927 = vmatpush1.bf16.msra.mxu0 0
        %928 = vmatprep.subr.bf16.mxu0 0
        %929 = vmatpush1.bf16.msra.mxu0 0
        %930 = vmatprep.subr.bf16.mxu0 0
        %931 = vmatpush1.bf16.msra.mxu0 0
        %932 = vmatprep.subr.bf16.mxu0 0
        %933 = vmatpush1.bf16.msra.mxu0 0
        %934 = vmatprep.subr.bf16.mxu0 0
        %935 = vmatpush1.bf16.msra.mxu0 0
        %936 = vmatprep.subr.bf16.mxu0 0
        %937 = vmatpush1.bf16.msra.mxu0 0
        %938 = vmatprep.subr.bf16.mxu0 0
        %939 = vmatpush1.bf16.msra.mxu0 0
        %940 = vmatprep.subr.bf16.mxu0 0
        %941 = vmatpush1.bf16.msra.mxu0 0
        %942 = vmatprep.subr.bf16.mxu0 0
        %943 = vmatpush1.bf16.msra.mxu0 0
        %944 = vmatprep.subr.bf16.mxu0 0
        %945 = vmatpush1.bf16.msra.mxu0 0
        %946 = vmatprep.mubr.bf16.mxu0 0
        %947 = vmatmul.mubr.bf16.gmra.mrb[0].mxu0 %v906
        %v948 = vpop.f32.mrb[0].mxu0
        %v949 = vadd.f32 0.0, %v948
        %v950 = vpop.f32.mrb[0].mxu0
        %v951 = vadd.f32 0.0, %v950
        %v952 = vpop.f32.mrb[0].mxu0
        %v953 = vpop.f32.mrb[0].mxu0
        %954 = vdwg.mxu0
        %v955 = vadd.f32 %v899, %v949
        %v956 = vadd.f32 %v900, %v951
        %s957 = scalar_lea.vmem %s5, 8
        %v958 = vld [vmem:[%s957] sm:$0x3]
        %v959 = vpack.c.bf16 %v384, %v384
        %v960 = vpack.c.bf16 %v388, %v388
        %v962 = vsel %vm429, %v958, 0
        %v965 = vsel %vm433, %v959, 0
        %v968 = vsel %vm433, %v960, 0
        %970 = vmatprep.subr.bf16.mxu0 %v968
        %971 = vmatpush1.bf16.msra.mxu0 %v965
        %972 = vmatprep.subr.bf16.mxu0 0
        %973 = vmatpush1.bf16.msra.mxu0 0
        %974 = vmatprep.subr.bf16.mxu0 0
        %975 = vmatpush1.bf16.msra.mxu0 0
        %976 = vmatprep.subr.bf16.mxu0 0
        %977 = vmatpush1.bf16.msra.mxu0 0
        %978 = vmatprep.subr.bf16.mxu0 0
        %979 = vmatpush1.bf16.msra.mxu0 0
        %980 = vmatprep.subr.bf16.mxu0 0
        %981 = vmatpush1.bf16.msra.mxu0 0
        %982 = vmatprep.subr.bf16.mxu0 0
        %983 = vmatpush1.bf16.msra.mxu0 0
        %984 = vmatprep.subr.bf16.mxu0 0
        %985 = vmatpush1.bf16.msra.mxu0 0
        %986 = vmatprep.subr.bf16.mxu0 0
        %987 = vmatpush1.bf16.msra.mxu0 0
        %988 = vmatprep.subr.bf16.mxu0 0
        %989 = vmatpush1.bf16.msra.mxu0 0
        %990 = vmatprep.subr.bf16.mxu0 0
        %991 = vmatpush1.bf16.msra.mxu0 0
        %992 = vmatprep.subr.bf16.mxu0 0
        %993 = vmatpush1.bf16.msra.mxu0 0
        %994 = vmatprep.subr.bf16.mxu0 0
        %995 = vmatpush1.bf16.msra.mxu0 0
        %996 = vmatprep.subr.bf16.mxu0 0
        %997 = vmatpush1.bf16.msra.mxu0 0
        %998 = vmatprep.subr.bf16.mxu0 0
        %999 = vmatpush1.bf16.msra.mxu0 0
        %1000 = vmatprep.subr.bf16.mxu0 0
        %1001 = vmatpush1.bf16.msra.mxu0 0
        %1002 = vmatprep.mubr.bf16.mxu0 0
        %1003 = vmatmul.mubr.bf16.gmra.mrb[0].mxu0 %v962
        %v1004 = vpop.f32.mrb[0].mxu0
        %v1005 = vadd.f32 0.0, %v1004
        %v1006 = vpop.f32.mrb[0].mxu0
        %v1007 = vadd.f32 0.0, %v1006
        %v1008 = vpop.f32.mrb[0].mxu0
        %v1009 = vpop.f32.mrb[0].mxu0
        %1010 = vdwg.mxu0
        %v1011 = vadd.f32 %v955, %v1005
        %v1012 = vadd.f32 %v956, %v1007
        %s1013 = scalar_lea.vmem %s4, 8
        %v1014 = vld [vmem:[%s1013] sm:$0x3]
        %v1015 = vpack.c.bf16 %v385, %v385
        %v1016 = vpack.c.bf16 %v413, %v413
        %v1018 = vsel %vm429, %v1014, 0
        %v1021 = vsel %vm433, %v1015, 0
        %v1024 = vsel %vm433, %v1016, 0
        %1026 = vmatprep.subr.bf16.mxu0 %v1024
        %1027 = vmatpush1.bf16.msra.mxu0 %v1021
        %1028 = vmatprep.subr.bf16.mxu0 0
        %1029 = vmatpush1.bf16.msra.mxu0 0
        %1030 = vmatprep.subr.bf16.mxu0 0
        %1031 = vmatpush1.bf16.msra.mxu0 0
        %1032 = vmatprep.subr.bf16.mxu0 0
        %1033 = vmatpush1.bf16.msra.mxu0 0
        %1034 = vmatprep.subr.bf16.mxu0 0
        %1035 = vmatpush1.bf16.msra.mxu0 0
        %1036 = vmatprep.subr.bf16.mxu0 0
        %1037 = vmatpush1.bf16.msra.mxu0 0
        %1038 = vmatprep.subr.bf16.mxu0 0
        %1039 = vmatpush1.bf16.msra.mxu0 0
        %1040 = vmatprep.subr.bf16.mxu0 0
        %1041 = vmatpush1.bf16.msra.mxu0 0
        %1042 = vmatprep.subr.bf16.mxu0 0
        %1043 = vmatpush1.bf16.msra.mxu0 0
        %1044 = vmatprep.subr.bf16.mxu0 0
        %1045 = vmatpush1.bf16.msra.mxu0 0
        %1046 = vmatprep.subr.bf16.mxu0 0
        %1047 = vmatpush1.bf16.msra.mxu0 0
        %1048 = vmatprep.subr.bf16.mxu0 0
        %1049 = vmatpush1.bf16.msra.mxu0 0
        %1050 = vmatprep.subr.bf16.mxu0 0
        %1051 = vmatpush1.bf16.msra.mxu0 0
        %1052 = vmatprep.subr.bf16.mxu0 0
        %1053 = vmatpush1.bf16.msra.mxu0 0
        %1054 = vmatprep.subr.bf16.mxu0 0
        %1055 = vmatpush1.bf16.msra.mxu0 0
        %1056 = vmatprep.subr.bf16.mxu0 0
        %1057 = vmatpush1.bf16.msra.mxu0 0
        %1058 = vmatprep.mubr.bf16.mxu0 0
        %1059 = vmatmul.mubr.bf16.gmra.mrb[0].mxu0 %v1018
        %v1060 = vpop.f32.mrb[0].mxu0
        %v1061 = vadd.f32 0.0, %v1060
        %v1062 = vpop.f32.mrb[0].mxu0
        %v1063 = vadd.f32 0.0, %v1062
        %v1064 = vpop.f32.mrb[0].mxu0
        %v1065 = vpop.f32.mrb[0].mxu0
        %1066 = vdwg.mxu0
        %v1067 = vadd.f32 %v1011, %v1061
        %v1068 = vadd.f32 %v1012, %v1063
        %s1069 = scalar_lea.vmem %s7, 10
        %v1070 = vld [vmem:[%s1069] sm:$0x3]
        %1071 = vrot.lane.b32.xlu0 %v384, 127
        %v1072 = vpop.permute.xlu0 %1071
        %1073 = vrot.lane.b32.xlu0 %v388, 127
        %v1074 = vpop.permute.xlu0 %1073
        %vm1075 = vcmp.lt.s32.totalorder %v395, 127
        %v1076 = vsel %vm1075, %v1072, %v1074
        %v1077 = vsel %vm1075, %v1074, %v1072
        %v1079 = vlaneseq
        %v1080 = vshrl.u32 %v1079, 7
        %v1081 = vsub.s32 0, %v1080
        %v1082 = vrot.slane %v1070, %v1081
        %v1083 = vlaneseq
        %v1084 = vshrl.u32 %v1083, 7
        %v1085 = vsub.s32 1, %v1084
        %v1086 = vrot.slane %v1070, %v1085
        %v1089 = vmul.f32 %v1076, %v1082
        %v1090 = vmul.f32 %v1077, %v1086
        %1091 = vrot.lane.b32.xlu0 %v385, 127
        %v1092 = vpop.permute.xlu0 %1091
        %1093 = vrot.lane.b32.xlu0 %v413, 127
        %v1094 = vpop.permute.xlu0 %1093
        %v1095 = vsel %vm1075, %v1092, %v1094
        %v1096 = vsel %vm1075, %v1094, %v1092
        %v1097 = vmul.f32 %v1095, %v1082
        %v1098 = vmul.f32 %v1096, %v1086
        %s1099 = scalar_lea.vmem %s5, 10
        %v1100 = vld [vmem:[%s1099] sm:$0x3]
        %v1101 = vpack.c.bf16 %v1089, %v1089
        %v1102 = vpack.c.bf16 %v1090, %v1090
        %v1104 = vsel %vm429, %v1100, 0
        %v1107 = vsel %vm433, %v1101, 0
        %v1110 = vsel %vm433, %v1102, 0
        %1112 = vmatprep.subr.bf16.mxu0 %v1110
        %1113 = vmatpush1.bf16.msra.mxu0 %v1107
        %1114 = vmatprep.subr.bf16.mxu0 0
        %1115 = vmatpush1.bf16.msra.mxu0 0
        %1116 = vmatprep.subr.bf16.mxu0 0
        %1117 = vmatpush1.bf16.msra.mxu0 0
        %1118 = vmatprep.subr.bf16.mxu0 0
        %1119 = vmatpush1.bf16.msra.mxu0 0
        %1120 = vmatprep.subr.bf16.mxu0 0
        %1121 = vmatpush1.bf16.msra.mxu0 0
        %1122 = vmatprep.subr.bf16.mxu0 0
        %1123 = vmatpush1.bf16.msra.mxu0 0
        %1124 = vmatprep.subr.bf16.mxu0 0
        %1125 = vmatpush1.bf16.msra.mxu0 0
        %1126 = vmatprep.subr.bf16.mxu0 0
        %1127 = vmatpush1.bf16.msra.mxu0 0
        %1128 = vmatprep.subr.bf16.mxu0 0
        %1129 = vmatpush1.bf16.msra.mxu0 0
        %1130 = vmatprep.subr.bf16.mxu0 0
        %1131 = vmatpush1.bf16.msra.mxu0 0
        %1132 = vmatprep.subr.bf16.mxu0 0
        %1133 = vmatpush1.bf16.msra.mxu0 0
        %1134 = vmatprep.subr.bf16.mxu0 0
        %1135 = vmatpush1.bf16.msra.mxu0 0
        %1136 = vmatprep.subr.bf16.mxu0 0
        %1137 = vmatpush1.bf16.msra.mxu0 0
        %1138 = vmatprep.subr.bf16.mxu0 0
        %1139 = vmatpush1.bf16.msra.mxu0 0
        %1140 = vmatprep.subr.bf16.mxu0 0
        %1141 = vmatpush1.bf16.msra.mxu0 0
        %1142 = vmatprep.subr.bf16.mxu0 0
        %1143 = vmatpush1.bf16.msra.mxu0 0
        %1144 = vmatprep.mubr.bf16.mxu0 0
        %1145 = vmatmul.mubr.bf16.gmra.mrb[0].mxu0 %v1104
        %v1146 = vpop.f32.mrb[0].mxu0
        %v1147 = vadd.f32 0.0, %v1146
        %v1148 = vpop.f32.mrb[0].mxu0
        %v1149 = vadd.f32 0.0, %v1148
        %v1150 = vpop.f32.mrb[0].mxu0
        %v1151 = vpop.f32.mrb[0].mxu0
        %1152 = vdwg.mxu0
        %v1153 = vadd.f32 %v1067, %v1147
        %v1154 = vadd.f32 %v1068, %v1149
        %s1155 = scalar_lea.vmem %s4, 10
        %v1156 = vld [vmem:[%s1155] sm:$0x3]
        %v1157 = vpack.c.bf16 %v1097, %v1097
        %v1158 = vpack.c.bf16 %v1098, %v1098
        %v1160 = vsel %vm429, %v1156, 0
        %v1163 = vsel %vm433, %v1157, 0
        %v1166 = vsel %vm433, %v1158, 0
        %1168 = vmatprep.subr.bf16.mxu0 %v1166
        %1169 = vmatpush1.bf16.msra.mxu0 %v1163
        %1170 = vmatprep.subr.bf16.mxu0 0
        %1171 = vmatpush1.bf16.msra.mxu0 0
        %1172 = vmatprep.subr.bf16.mxu0 0
        %1173 = vmatpush1.bf16.msra.mxu0 0
        %1174 = vmatprep.subr.bf16.mxu0 0
        %1175 = vmatpush1.bf16.msra.mxu0 0
        %1176 = vmatprep.subr.bf16.mxu0 0
        %1177 = vmatpush1.bf16.msra.mxu0 0
        %1178 = vmatprep.subr.bf16.mxu0 0
        %1179 = vmatpush1.bf16.msra.mxu0 0
        %1180 = vmatprep.subr.bf16.mxu0 0
        %1181 = vmatpush1.bf16.msra.mxu0 0
        %1182 = vmatprep.subr.bf16.mxu0 0
        %1183 = vmatpush1.bf16.msra.mxu0 0
        %1184 = vmatprep.subr.bf16.mxu0 0
        %1185 = vmatpush1.bf16.msra.mxu0 0
        %1186 = vmatprep.subr.bf16.mxu0 0
        %1187 = vmatpush1.bf16.msra.mxu0 0
        %1188 = vmatprep.subr.bf16.mxu0 0
        %1189 = vmatpush1.bf16.msra.mxu0 0
        %1190 = vmatprep.subr.bf16.mxu0 0
        %1191 = vmatpush1.bf16.msra.mxu0 0
        %1192 = vmatprep.subr.bf16.mxu0 0
        %1193 = vmatpush1.bf16.msra.mxu0 0
        %1194 = vmatprep.subr.bf16.mxu0 0
        %1195 = vmatpush1.bf16.msra.mxu0 0
        %1196 = vmatprep.subr.bf16.mxu0 0
        %1197 = vmatpush1.bf16.msra.mxu0 0
        %1198 = vmatprep.subr.bf16.mxu0 0
        %1199 = vmatpush1.bf16.msra.mxu0 0
        %1200 = vmatprep.mubr.bf16.mxu0 0
        %1201 = vmatmul.mubr.bf16.gmra.mrb[0].mxu0 %v1160
        %v1202 = vpop.f32.mrb[0].mxu0
        %v1203 = vadd.f32 0.0, %v1202
        %v1204 = vpop.f32.mrb[0].mxu0
        %v1205 = vadd.f32 0.0, %v1204
        %v1206 = vpop.f32.mrb[0].mxu0
        %v1207 = vpop.f32.mrb[0].mxu0
        %1208 = vdwg.mxu0
        %v1209 = vadd.f32 %v1153, %v1203
        %v1210 = vadd.f32 %v1154, %v1205
        %s1211 = scalar_lea.vmem %s7, 12
        %v1212 = vld [vmem:[%s1211] sm:$0x3]
        %1213 = vrot.lane.b32.xlu0 %v384, 113
        %v1214 = vpop.permute.xlu0 %1213
        %1215 = vrot.lane.b32.xlu0 %v388, 113
        %v1216 = vpop.permute.xlu0 %1215
        %vm1217 = vcmp.lt.s32.totalorder %v395, 113
        %v1218 = vsel %vm1217, %v1214, %v1216
        %v1219 = vsel %vm1217, %v1216, %v1214
        %v1221 = vlaneseq
        %v1222 = vshrl.u32 %v1221, 7
        %v1223 = vsub.s32 0, %v1222
        %v1224 = vrot.slane %v1212, %v1223
        %v1225 = vlaneseq
        %v1226 = vshrl.u32 %v1225, 7
        %v1227 = vsub.s32 1, %v1226
        %v1228 = vrot.slane %v1212, %v1227
        %v1231 = vmul.f32 %v1218, %v1224
        %v1232 = vmul.f32 %v1219, %v1228
        %1233 = vrot.lane.b32.xlu0 %v385, 113
        %v1234 = vpop.permute.xlu0 %1233
        %1235 = vrot.lane.b32.xlu0 %v413, 113
        %v1236 = vpop.permute.xlu0 %1235
        %v1237 = vsel %vm1217, %v1234, %v1236
        %v1238 = vsel %vm1217, %v1236, %v1234
        %v1239 = vmul.f32 %v1237, %v1224
        %v1240 = vmul.f32 %v1238, %v1228
        %s1241 = scalar_lea.vmem %s5, 12
        %v1242 = vld [vmem:[%s1241] sm:$0x3]
        %v1243 = vpack.c.bf16 %v1231, %v1231
        %v1244 = vpack.c.bf16 %v1232, %v1232
        %v1246 = vsel %vm429, %v1242, 0
        %v1249 = vsel %vm433, %v1243, 0
        %v1252 = vsel %vm433, %v1244, 0
        %1254 = vmatprep.subr.bf16.mxu0 %v1252
        %1255 = vmatpush1.bf16.msra.mxu0 %v1249
        %1256 = vmatprep.subr.bf16.mxu0 0
        %1257 = vmatpush1.bf16.msra.mxu0 0
        %1258 = vmatprep.subr.bf16.mxu0 0
        %1259 = vmatpush1.bf16.msra.mxu0 0
        %1260 = vmatprep.subr.bf16.mxu0 0
        %1261 = vmatpush1.bf16.msra.mxu0 0
        %1262 = vmatprep.subr.bf16.mxu0 0
        %1263 = vmatpush1.bf16.msra.mxu0 0
        %1264 = vmatprep.subr.bf16.mxu0 0
        %1265 = vmatpush1.bf16.msra.mxu0 0
        %1266 = vmatprep.subr.bf16.mxu0 0
        %1267 = vmatpush1.bf16.msra.mxu0 0
        %1268 = vmatprep.subr.bf16.mxu0 0
        %1269 = vmatpush1.bf16.msra.mxu0 0
        %1270 = vmatprep.subr.bf16.mxu0 0
        %1271 = vmatpush1.bf16.msra.mxu0 0
        %1272 = vmatprep.subr.bf16.mxu0 0
        %1273 = vmatpush1.bf16.msra.mxu0 0
        %1274 = vmatprep.subr.bf16.mxu0 0
        %1275 = vmatpush1.bf16.msra.mxu0 0
        %1276 = vmatprep.subr.bf16.mxu0 0
        %1277 = vmatpush1.bf16.msra.mxu0 0
        %1278 = vmatprep.subr.bf16.mxu0 0
        %1279 = vmatpush1.bf16.msra.mxu0 0
        %1280 = vmatprep.subr.bf16.mxu0 0
        %1281 = vmatpush1.bf16.msra.mxu0 0
        %1282 = vmatprep.subr.bf16.mxu0 0
        %1283 = vmatpush1.bf16.msra.mxu0 0
        %1284 = vmatprep.subr.bf16.mxu0 0
        %1285 = vmatpush1.bf16.msra.mxu0 0
        %1286 = vmatprep.mubr.bf16.mxu0 0
        %1287 = vmatmul.mubr.bf16.gmra.mrb[0].mxu0 %v1246
        %v1288 = vpop.f32.mrb[0].mxu0
        %v1289 = vadd.f32 0.0, %v1288
        %v1290 = vpop.f32.mrb[0].mxu0
        %v1291 = vadd.f32 0.0, %v1290
        %v1292 = vpop.f32.mrb[0].mxu0
        %v1293 = vpop.f32.mrb[0].mxu0
        %1294 = vdwg.mxu0
        %v1295 = vadd.f32 %v1209, %v1289
        %v1296 = vadd.f32 %v1210, %v1291
        %s1297 = scalar_lea.vmem %s4, 12
        %v1298 = vld [vmem:[%s1297] sm:$0x3]
        %v1299 = vpack.c.bf16 %v1239, %v1239
        %v1300 = vpack.c.bf16 %v1240, %v1240
        %v1302 = vsel %vm429, %v1298, 0
        %v1305 = vsel %vm433, %v1299, 0
        %v1308 = vsel %vm433, %v1300, 0
        %1310 = vmatprep.subr.bf16.mxu0 %v1308
        %1311 = vmatpush1.bf16.msra.mxu0 %v1305
        %1312 = vmatprep.subr.bf16.mxu0 0
        %1313 = vmatpush1.bf16.msra.mxu0 0
        %1314 = vmatprep.subr.bf16.mxu0 0
        %1315 = vmatpush1.bf16.msra.mxu0 0
        %1316 = vmatprep.subr.bf16.mxu0 0
        %1317 = vmatpush1.bf16.msra.mxu0 0
        %1318 = vmatprep.subr.bf16.mxu0 0
        %1319 = vmatpush1.bf16.msra.mxu0 0
        %1320 = vmatprep.subr.bf16.mxu0 0
        %1321 = vmatpush1.bf16.msra.mxu0 0
        %1322 = vmatprep.subr.bf16.mxu0 0
        %1323 = vmatpush1.bf16.msra.mxu0 0
        %1324 = vmatprep.subr.bf16.mxu0 0
        %1325 = vmatpush1.bf16.msra.mxu0 0
        %1326 = vmatprep.subr.bf16.mxu0 0
        %1327 = vmatpush1.bf16.msra.mxu0 0
        %1328 = vmatprep.subr.bf16.mxu0 0
        %1329 = vmatpush1.bf16.msra.mxu0 0
        %1330 = vmatprep.subr.bf16.mxu0 0
        %1331 = vmatpush1.bf16.msra.mxu0 0
        %1332 = vmatprep.subr.bf16.mxu0 0
        %1333 = vmatpush1.bf16.msra.mxu0 0
        %1334 = vmatprep.subr.bf16.mxu0 0
        %1335 = vmatpush1.bf16.msra.mxu0 0
        %1336 = vmatprep.subr.bf16.mxu0 0
        %1337 = vmatpush1.bf16.msra.mxu0 0
        %1338 = vmatprep.subr.bf16.mxu0 0
        %1339 = vmatpush1.bf16.msra.mxu0 0
        %1340 = vmatprep.subr.bf16.mxu0 0
        %1341 = vmatpush1.bf16.msra.mxu0 0
        %1342 = vmatprep.mubr.bf16.mxu0 0
        %1343 = vmatmul.mubr.bf16.gmra.mrb[0].mxu0 %v1302
        %v1344 = vpop.f32.mrb[0].mxu0
        %v1345 = vadd.f32 0.0, %v1344
        %v1346 = vpop.f32.mrb[0].mxu0
        %v1347 = vadd.f32 0.0, %v1346
        %v1348 = vpop.f32.mrb[0].mxu0
        %v1349 = vpop.f32.mrb[0].mxu0
        %1350 = vdwg.mxu0
        %v1351 = vadd.f32 %v1295, %v1345
        %v1352 = vadd.f32 %v1296, %v1347
        %s1353 = scalar_lea.vmem %s7, 14
        %v1354 = vld [vmem:[%s1353] sm:$0x3]
        %1355 = vrot.lane.b32.xlu0 %v384, 112
        %v1356 = vpop.permute.xlu0 %1355
        %1357 = vrot.lane.b32.xlu0 %v388, 112
        %v1358 = vpop.permute.xlu0 %1357
        %vm1359 = vcmp.lt.s32.totalorder %v395, 112
        %v1360 = vsel %vm1359, %v1356, %v1358
        %v1361 = vsel %vm1359, %v1358, %v1356
        %v1363 = vlaneseq
        %v1364 = vshrl.u32 %v1363, 7
        %v1365 = vsub.s32 0, %v1364
        %v1366 = vrot.slane %v1354, %v1365
        %v1367 = vlaneseq
        %v1368 = vshrl.u32 %v1367, 7
        %v1369 = vsub.s32 1, %v1368
        %v1370 = vrot.slane %v1354, %v1369
        %v1373 = vmul.f32 %v1360, %v1366
        %v1374 = vmul.f32 %v1361, %v1370
        %1375 = vrot.lane.b32.xlu0 %v385, 112
        %v1376 = vpop.permute.xlu0 %1375
        %1377 = vrot.lane.b32.xlu0 %v413, 112
        %v1378 = vpop.permute.xlu0 %1377
        %v1379 = vsel %vm1359, %v1376, %v1378
        %v1380 = vsel %vm1359, %v1378, %v1376
        %v1381 = vmul.f32 %v1379, %v1366
        %v1382 = vmul.f32 %v1380, %v1370
        %s1383 = scalar_lea.vmem %s5, 14
        %v1384 = vld [vmem:[%s1383] sm:$0x3]
        %v1385 = vpack.c.bf16 %v1373, %v1373
        %v1386 = vpack.c.bf16 %v1374, %v1374
        %v1388 = vsel %vm429, %v1384, 0
        %v1391 = vsel %vm433, %v1385, 0
        %v1394 = vsel %vm433, %v1386, 0
        %1396 = vmatprep.subr.bf16.mxu0 %v1394
        %1397 = vmatpush1.bf16.msra.mxu0 %v1391
        %1398 = vmatprep.subr.bf16.mxu0 0
        %1399 = vmatpush1.bf16.msra.mxu0 0
        %1400 = vmatprep.subr.bf16.mxu0 0
        %1401 = vmatpush1.bf16.msra.mxu0 0
        %1402 = vmatprep.subr.bf16.mxu0 0
        %1403 = vmatpush1.bf16.msra.mxu0 0
        %1404 = vmatprep.subr.bf16.mxu0 0
        %1405 = vmatpush1.bf16.msra.mxu0 0
        %1406 = vmatprep.subr.bf16.mxu0 0
        %1407 = vmatpush1.bf16.msra.mxu0 0
        %1408 = vmatprep.subr.bf16.mxu0 0
        %1409 = vmatpush1.bf16.msra.mxu0 0
        %1410 = vmatprep.subr.bf16.mxu0 0
        %1411 = vmatpush1.bf16.msra.mxu0 0
        %1412 = vmatprep.subr.bf16.mxu0 0
        %1413 = vmatpush1.bf16.msra.mxu0 0
        %1414 = vmatprep.subr.bf16.mxu0 0
        %1415 = vmatpush1.bf16.msra.mxu0 0
        %1416 = vmatprep.subr.bf16.mxu0 0
        %1417 = vmatpush1.bf16.msra.mxu0 0
        %1418 = vmatprep.subr.bf16.mxu0 0
        %1419 = vmatpush1.bf16.msra.mxu0 0
        %1420 = vmatprep.subr.bf16.mxu0 0
        %1421 = vmatpush1.bf16.msra.mxu0 0
        %1422 = vmatprep.subr.bf16.mxu0 0
        %1423 = vmatpush1.bf16.msra.mxu0 0
        %1424 = vmatprep.subr.bf16.mxu0 0
        %1425 = vmatpush1.bf16.msra.mxu0 0
        %1426 = vmatprep.subr.bf16.mxu0 0
        %1427 = vmatpush1.bf16.msra.mxu0 0
        %1428 = vmatprep.mubr.bf16.mxu0 0
        %1429 = vmatmul.mubr.bf16.gmra.mrb[0].mxu0 %v1388
        %v1430 = vpop.f32.mrb[0].mxu0
        %v1431 = vadd.f32 0.0, %v1430
        %v1432 = vpop.f32.mrb[0].mxu0
        %v1433 = vadd.f32 0.0, %v1432
        %v1434 = vpop.f32.mrb[0].mxu0
        %v1435 = vpop.f32.mrb[0].mxu0
        %1436 = vdwg.mxu0
        %v1437 = vadd.f32 %v1351, %v1431
        %v1438 = vadd.f32 %v1352, %v1433
        %s1439 = scalar_lea.vmem %s4, 14
        %v1440 = vld [vmem:[%s1439] sm:$0x3]
        %v1441 = vpack.c.bf16 %v1381, %v1381
        %v1442 = vpack.c.bf16 %v1382, %v1382
        %v1444 = vsel %vm429, %v1440, 0
        %v1447 = vsel %vm433, %v1441, 0
        %v1450 = vsel %vm433, %v1442, 0
        %1452 = vmatprep.subr.bf16.mxu0 %v1450
        %1453 = vmatpush1.bf16.msra.mxu0 %v1447
        %1454 = vmatprep.subr.bf16.mxu0 0
        %1455 = vmatpush1.bf16.msra.mxu0 0
        %1456 = vmatprep.subr.bf16.mxu0 0
        %1457 = vmatpush1.bf16.msra.mxu0 0
        %1458 = vmatprep.subr.bf16.mxu0 0
        %1459 = vmatpush1.bf16.msra.mxu0 0
        %1460 = vmatprep.subr.bf16.mxu0 0
        %1461 = vmatpush1.bf16.msra.mxu0 0
        %1462 = vmatprep.subr.bf16.mxu0 0
        %1463 = vmatpush1.bf16.msra.mxu0 0
        %1464 = vmatprep.subr.bf16.mxu0 0
        %1465 = vmatpush1.bf16.msra.mxu0 0
        %1466 = vmatprep.subr.bf16.mxu0 0
        %1467 = vmatpush1.bf16.msra.mxu0 0
        %1468 = vmatprep.subr.bf16.mxu0 0
        %1469 = vmatpush1.bf16.msra.mxu0 0
        %1470 = vmatprep.subr.bf16.mxu0 0
        %1471 = vmatpush1.bf16.msra.mxu0 0
        %1472 = vmatprep.subr.bf16.mxu0 0
        %1473 = vmatpush1.bf16.msra.mxu0 0
        %1474 = vmatprep.subr.bf16.mxu0 0
        %1475 = vmatpush1.bf16.msra.mxu0 0
        %1476 = vmatprep.subr.bf16.mxu0 0
        %1477 = vmatpush1.bf16.msra.mxu0 0
        %1478 = vmatprep.subr.bf16.mxu0 0
        %1479 = vmatpush1.bf16.msra.mxu0 0
        %1480 = vmatprep.subr.bf16.mxu0 0
        %1481 = vmatpush1.bf16.msra.mxu0 0
        %1482 = vmatprep.subr.bf16.mxu0 0
        %1483 = vmatpush1.bf16.msra.mxu0 0
        %1484 = vmatprep.mubr.bf16.mxu0 0
        %1485 = vmatmul.mubr.bf16.gmra.mrb[0].mxu0 %v1444
        %v1486 = vpop.f32.mrb[0].mxu0
        %v1487 = vadd.f32 0.0, %v1486
        %v1488 = vpop.f32.mrb[0].mxu0
        %v1489 = vadd.f32 0.0, %v1488
        %v1490 = vpop.f32.mrb[0].mxu0
        %v1491 = vpop.f32.mrb[0].mxu0
        %1492 = vdwg.mxu0
        %v1493 = vadd.f32 %v1437, %v1487
        %v1494 = vadd.f32 %v1438, %v1489
        %s1495 = scalar_lea.vmem %s7, 16
        %v1496 = vld [vmem:[%s1495] sm:$0x3]
        %1497 = vrot.lane.b32.xlu0 %v384, 111
        %v1498 = vpop.permute.xlu0 %1497
        %1499 = vrot.lane.b32.xlu0 %v388, 111
        %v1500 = vpop.permute.xlu0 %1499
        %vm1501 = vcmp.lt.s32.totalorder %v395, 111
        %v1502 = vsel %vm1501, %v1498, %v1500
        %v1503 = vsel %vm1501, %v1500, %v1498
        %v1505 = vlaneseq
        %v1506 = vshrl.u32 %v1505, 7
        %v1507 = vsub.s32 0, %v1506
        %v1508 = vrot.slane %v1496, %v1507
        %v1509 = vlaneseq
        %v1510 = vshrl.u32 %v1509, 7
        %v1511 = vsub.s32 1, %v1510
        %v1512 = vrot.slane %v1496, %v1511
        %v1515 = vmul.f32 %v1502, %v1508
        %v1516 = vmul.f32 %v1503, %v1512
        %1517 = vrot.lane.b32.xlu0 %v385, 111
        %v1518 = vpop.permute.xlu0 %1517
        %1519 = vrot.lane.b32.xlu0 %v413, 111
        %v1520 = vpop.permute.xlu0 %1519
        %v1521 = vsel %vm1501, %v1518, %v1520
        %v1522 = vsel %vm1501, %v1520, %v1518
        %v1523 = vmul.f32 %v1521, %v1508
        %v1524 = vmul.f32 %v1522, %v1512
        %s1525 = scalar_lea.vmem %s5, 16
        %v1526 = vld [vmem:[%s1525] sm:$0x3]
        %v1527 = vpack.c.bf16 %v1515, %v1515
        %v1528 = vpack.c.bf16 %v1516, %v1516
        %v1530 = vsel %vm429, %v1526, 0
        %v1533 = vsel %vm433, %v1527, 0
        %v1536 = vsel %vm433, %v1528, 0
        %1538 = vmatprep.subr.bf16.mxu0 %v1536
        %1539 = vmatpush1.bf16.msra.mxu0 %v1533
        %1540 = vmatprep.subr.bf16.mxu0 0
        %1541 = vmatpush1.bf16.msra.mxu0 0
        %1542 = vmatprep.subr.bf16.mxu0 0
        %1543 = vmatpush1.bf16.msra.mxu0 0
        %1544 = vmatprep.subr.bf16.mxu0 0
        %1545 = vmatpush1.bf16.msra.mxu0 0
        %1546 = vmatprep.subr.bf16.mxu0 0
        %1547 = vmatpush1.bf16.msra.mxu0 0
        %1548 = vmatprep.subr.bf16.mxu0 0
        %1549 = vmatpush1.bf16.msra.mxu0 0
        %1550 = vmatprep.subr.bf16.mxu0 0
        %1551 = vmatpush1.bf16.msra.mxu0 0
        %1552 = vmatprep.subr.bf16.mxu0 0
        %1553 = vmatpush1.bf16.msra.mxu0 0
        %1554 = vmatprep.subr.bf16.mxu0 0
        %1555 = vmatpush1.bf16.msra.mxu0 0
        %1556 = vmatprep.subr.bf16.mxu0 0
        %1557 = vmatpush1.bf16.msra.mxu0 0
        %1558 = vmatprep.subr.bf16.mxu0 0
        %1559 = vmatpush1.bf16.msra.mxu0 0
        %1560 = vmatprep.subr.bf16.mxu0 0
        %1561 = vmatpush1.bf16.msra.mxu0 0
        %1562 = vmatprep.subr.bf16.mxu0 0
        %1563 = vmatpush1.bf16.msra.mxu0 0
        %1564 = vmatprep.subr.bf16.mxu0 0
        %1565 = vmatpush1.bf16.msra.mxu0 0
        %1566 = vmatprep.subr.bf16.mxu0 0
        %1567 = vmatpush1.bf16.msra.mxu0 0
        %1568 = vmatprep.subr.bf16.mxu0 0
        %1569 = vmatpush1.bf16.msra.mxu0 0
        %1570 = vmatprep.mubr.bf16.mxu0 0
        %1571 = vmatmul.mubr.bf16.gmra.mrb[0].mxu0 %v1530
        %v1572 = vpop.f32.mrb[0].mxu0
        %v1573 = vadd.f32 0.0, %v1572
        %v1574 = vpop.f32.mrb[0].mxu0
        %v1575 = vadd.f32 0.0, %v1574
        %v1576 = vpop.f32.mrb[0].mxu0
        %v1577 = vpop.f32.mrb[0].mxu0
        %1578 = vdwg.mxu0
        %v1579 = vadd.f32 %v1493, %v1573
        %v1580 = vadd.f32 %v1494, %v1575
        %s1581 = scalar_lea.vmem %s4, 16
        %v1582 = vld [vmem:[%s1581] sm:$0x3]
        %v1583 = vpack.c.bf16 %v1523, %v1523
        %v1584 = vpack.c.bf16 %v1524, %v1524
        %v1586 = vsel %vm429, %v1582, 0
        %v1589 = vsel %vm433, %v1583, 0
        %v1592 = vsel %vm433, %v1584, 0
        %1594 = vmatprep.subr.bf16.mxu0 %v1592
        %1595 = vmatpush1.bf16.msra.mxu0 %v1589
        %1596 = vmatprep.subr.bf16.mxu0 0
        %1597 = vmatpush1.bf16.msra.mxu0 0
        %1598 = vmatprep.subr.bf16.mxu0 0
        %1599 = vmatpush1.bf16.msra.mxu0 0
        %1600 = vmatprep.subr.bf16.mxu0 0
        %1601 = vmatpush1.bf16.msra.mxu0 0
        %1602 = vmatprep.subr.bf16.mxu0 0
        %1603 = vmatpush1.bf16.msra.mxu0 0
        %1604 = vmatprep.subr.bf16.mxu0 0
        %1605 = vmatpush1.bf16.msra.mxu0 0
        %1606 = vmatprep.subr.bf16.mxu0 0
        %1607 = vmatpush1.bf16.msra.mxu0 0
        %1608 = vmatprep.subr.bf16.mxu0 0
        %1609 = vmatpush1.bf16.msra.mxu0 0
        %1610 = vmatprep.subr.bf16.mxu0 0
        %1611 = vmatpush1.bf16.msra.mxu0 0
        %1612 = vmatprep.subr.bf16.mxu0 0
        %1613 = vmatpush1.bf16.msra.mxu0 0
        %1614 = vmatprep.subr.bf16.mxu0 0
        %1615 = vmatpush1.bf16.msra.mxu0 0
        %1616 = vmatprep.subr.bf16.mxu0 0
        %1617 = vmatpush1.bf16.msra.mxu0 0
        %1618 = vmatprep.subr.bf16.mxu0 0
        %1619 = vmatpush1.bf16.msra.mxu0 0
        %1620 = vmatprep.subr.bf16.mxu0 0
        %1621 = vmatpush1.bf16.msra.mxu0 0
        %1622 = vmatprep.subr.bf16.mxu0 0
        %1623 = vmatpush1.bf16.msra.mxu0 0
        %1624 = vmatprep.subr.bf16.mxu0 0
        %1625 = vmatpush1.bf16.msra.mxu0 0
        %1626 = vmatprep.mubr.bf16.mxu0 0
        %1627 = vmatmul.mubr.bf16.gmra.mrb[0].mxu0 %v1586
        %v1628 = vpop.f32.mrb[0].mxu0
        %v1629 = vadd.f32 0.0, %v1628
        %v1630 = vpop.f32.mrb[0].mxu0
        %v1631 = vadd.f32 0.0, %v1630
        %v1632 = vpop.f32.mrb[0].mxu0
        %v1633 = vpop.f32.mrb[0].mxu0
        %1634 = vdwg.mxu0
        %v1635 = vadd.f32 %v1579, %v1629
        %v1636 = vadd.f32 %v1580, %v1631
        %v1637 = vld [vmem:[%s369] sm:$0xf]
        %1639 = vset.pattern.permute.xlu0 0
        %1640 = vperm.xlu0 %1639, %v1637
        %v1641 = vpop.permute.xlu0 %1640
        %v1643 = vadd.f32 %v1635, %v1641
        %v1644 = vadd.f32 %v1636, %v1641
        %v1647 = vcombine.low %v1643, %v1644
        %v1649 = vsub.f32 %v378, %v1647
        %v1650 = vand.u32 2147483647, %v1649
        %v1652 = vcombine.high %v1650, %v1650
        %vm1654 = vcmask 1043456
        %v1655 = vsel %vm1654, %v1650, 0.0
        %v1656 = vsel %vm1654, %v1652, 0.0
        %v1657 = vadd.f32 %v1655, %v1656
        %1658 = vadd.xlane.f32.xlu0 %v1657
        %v1659 = vpop.xlane.xlu0 %1658
        %v1660 = vrot.slane %v1659, 4
        %v1661 = vadd.f32 %v1659, %v1660
        %v1662 = vrot.slane %v1661, 2
        %v1663 = vadd.f32 %v1661, %v1662
        %v1664 = vrot.slane %v1663, 1
        %v1665 = vadd.f32 %v1663, %v1664
        %s1666 = vtos %v1665
        %v1667 = vstv %s1666
        %vm1668 = vcmask 0
        %1669 = vst.msk [vmem:[%s372] sm:$0x1] %vm1668, %v1667
        %p1670 = scmp.lt.s32.totalorder %s20, 1
        %s1671 = scalar_select %p1670, %s20, 1
        %s1672 = scalar_lea.vmem %s8, %s1671
        // Predicated region
        $region57: #{forward.1} parent=51 // pred_check
          %p1673 = pneg %p226
        $region58: #{forward.1} parent=51 // pred_check_branch
          %1675 = sbr.rel (%p1673) target = $region60
        $region59: #{forward.1} parent=51 // pred_region
          _
        $region60: #{forward.1} parent=51 // pred_fallthru
          _
      $region52: #{forward.1} parent=5 // pred_fallthru
        _
      %p1676 = scmp.le.s32.totalorder 2, %s15
      // Predicated region
      $region61: #{forward.1} parent=5 // pred_check
        %p1677 = pneg %p1676
      $region62: #{forward.1} parent=5 // pred_check_branch
        %1679 = sbr.rel (%p1677) target = $region64
      $region63: #{forward.1} parent=5 // pred_region
        %s1680 = ssub.s32 %s15, 2
        // Predicated region
        $region65: #{forward.1} parent=63 // pred_check
          %p1681 = pneg %p232
        $region66: #{forward.1} parent=63 // pred_check_branch
          %1683 = sbr.rel (%p1681) target = $region68
        $region67: #{forward.1} parent=63 // pred_region
          %p1684 = scmp.lt.s32.totalorder %s21, 1
          %s1685 = scalar_select %p1684, %s21, 1
          %s1686 = scalar_lea.vmem %s8, %s1685
        $region68: #{forward.1} parent=63 // pred_fallthru
          _
      $region64: #{forward.1} parent=5 // pred_fallthru
        _
    $region6: #{forward.1} parent=1 // loop_footer
      %s19 = sadd.s32 1, %s15
    $region7: #{forward.1} parent=1 // loop_footer_branch
      %14 = sbr.rel target = $region3
    $region8: #{forward.1} parent=1 // loop_exit
      _
    %1687 = vsyncpa [#allocation3], 1
    %s1688 = scalar_lea.sflag [#allocation3], 1
    %1689 = vsyncpa %s1688, 1

</llo_original>
